<compile_context>
chip_gen: v6e
topology: v6e:2x2x1
jax: 0.10.0
libtpu: 0.0.40
codegen_flags: <defaults>
</compile_context>

<pallas_src>
import numpy as np
import jax
import jax.numpy as jnp
from jax.experimental import pallas as pl
from jax.experimental.pallas import tpu as pltpu


# ----------------------------- Pallas kernel --------------------------------

def _make_global_mlp_kernel(n_cov, n_hidden, n_horizons):
    """Ref order:
         state, cov_0..cov_{n_cov-1},
         w0_piece_0..w0_piece_{n_cov}, b0,
         (w_i, b_i) for each hidden tail layer,
         w_g, b_g, w_loc (H, K, L), b_loc (H, 1, L),
         out_global (tb, G), out_local (H, tb, L)
    """

    def kernel(*refs):
        i = 0
        state_ref = refs[i]; i += 1
        cov_refs = refs[i:i + n_cov]; i += n_cov
        w0_refs = refs[i:i + n_cov + 1]; i += n_cov + 1
        b0_ref = refs[i]; i += 1
        hidden = refs[i:i + 2 * n_hidden]; i += 2 * n_hidden
        wg_ref, bg_ref = refs[i], refs[i + 1]; i += 2
        wl_ref, bl_ref = refs[i], refs[i + 1]; i += 2
        out_g_ref, out_l_ref = refs[i], refs[i + 1]

        mxu = jnp.bfloat16

        # --- Layer 0: split-K over the (never materialized) concat pieces ----
        acc = jnp.dot(state_ref[...].astype(mxu), w0_refs[0][...],
                      preferred_element_type=jnp.float32)
        for c in range(n_cov):
            piece = cov_refs[c][:, :n_horizons].astype(mxu)   # fused [:, :H] slice
            acc = acc + jnp.dot(piece, w0_refs[1 + c][...],
                                preferred_element_type=jnp.float32)
        h = jnp.maximum(acc + b0_ref[...], 0.0)   # bias + ReLU stay in f32

        # --- Hidden tail layers (unrolled at trace time) ----------------------
        for li in range(n_hidden):
            w = hidden[2 * li][...]
            b = hidden[2 * li + 1][...]
            h = jnp.maximum(
                jnp.dot(h.astype(mxu), w, preferred_element_type=jnp.float32) + b,
                0.0)

        # --- Final linear layer, split-N (both outputs at lane offset 0) ------
        h_b = h.astype(mxu)
        out_g_ref[...] = (jnp.dot(h_b, wg_ref[...],
                                  preferred_element_type=jnp.float32)
                          + bg_ref[...]).astype(out_g_ref.dtype)
        # Per-horizon column pieces -> direct (H, tb, L) stores.  This fuses the
        # PyTorch transpose(0, 1) into the kernel (no extra HBM round-trip).
        for hz in range(n_horizons):
            out_l_ref[hz] = (jnp.dot(h_b, wl_ref[hz],
                                     preferred_element_type=jnp.float32)
                             + bl_ref[hz]).astype(out_l_ref.dtype)

    return kernel


# --------------------------- host-side wrapper --------------------------------

def _round_up(x, m):
    return ((x + m - 1) // m) * m


def _pick_batch_tile(B):
    # HBM- and grid-step-overhead-bound kernel: use large tiles (multiple of 8),
    # but keep >=2 grid steps when the batch allows so both v7x TensorCores get
    # work on the "parallel" batch axis.
    if B <= 16:
        return B
    tile = min(4096, _round_up(pl.cdiv(B, 2), 8))
    return max(8, min(tile, _round_up(B, 8)))


def global_mlp_forward_pallas(state, covariates, w0_pieces, b0,
                              hidden_w, hidden_b, wg, bg, wl, bl, *,
                              n_horizons, batch_tile=None,
                              out_dtype=jnp.float32):
    """state: (B, S) f32; covariates[i]: (B, >=H) f32.
    w0_pieces: bf16 row-splits of the first-layer weight (split-K over the fused
    concat).  hidden_*: layers 1..L-2.  wg/bg: global columns of the last layer.
    wl/bl: per-horizon local columns of the last layer, stacked (H, K, L)/(H, 1, L)."""
    B = state.shape[0]
    n_cov = len(covariates)
    n_hidden = len(hidden_w)
    G = wg.shape[1]
    H, _, L = wl.shape
    assert H == n_horizons

    tb = _pick_batch_tile(B) if batch_tile is None else batch_tile
    grid = (pl.cdiv(B, tb),)

    def over_batch(arr):
        rest = (0,) * (arr.ndim - 1)
        return pl.BlockSpec((tb,) + tuple(arr.shape[1:]), lambda i, rest=rest: (i,) + rest)

    def resident(arr):
        # Same block index every grid step -> stays VMEM-resident across steps.
        zeros = (0,) * arr.ndim
        return pl.BlockSpec(tuple(arr.shape), lambda i, zeros=zeros: zeros)

    operands = [state, *covariates, *w0_pieces, b0]
    in_specs = [over_batch(state)] + [over_batch(c) for c in covariates]
    in_specs += [resident(w) for w in w0_pieces] + [resident(b0)]
    for w, b in zip(hidden_w, hidden_b):
        operands += [w, b]
        in_specs += [resident(w), resident(b)]
    operands += [wg, bg, wl, bl]
    in_specs += [resident(wg), resident(bg), resident(wl), resident(bl)]

    out_shape = (jax.ShapeDtypeStruct((B, G), out_dtype),
                 jax.ShapeDtypeStruct((H, B, L), out_dtype))
    out_specs = (pl.BlockSpec((tb, G), lambda i: (i, 0)),
                 pl.BlockSpec((H, tb, L), lambda i: (0, i, 0)))

    # Scoped-VMEM budget for large tiles (v5e defaults to 16 MiB); capped well
    # below v7x's 64 MiB physical VMEM.
    def nbytes(a):
        return int(np.prod(a.shape)) * jnp.dtype(a.dtype).itemsize

    params = [*w0_pieces, b0, *hidden_w, *hidden_b, wg, bg, wl, bl]
    out_isz = jnp.dtype(out_dtype).itemsize
    stream_row = (state.shape[1] * state.dtype.itemsize
                  + sum(c.shape[1] * c.dtype.itemsize for c in covariates)
                  + G * out_isz + H * L * out_isz)
    act_widths = b0.shape[1] + sum(b.shape[1] for b in hidden_b) + G + H * L
    est = (2 * tb * stream_row            # double-buffered streamed blocks
           + 6 * tb * act_widths          # f32 intermediates + bf16 copies + slack
           + 2 * sum(nbytes(p) for p in params)
           + (4 << 20))
    vmem_limit = int(min(48 << 20, max(16 << 20, est)))

    kernel = _make_global_mlp_kernel(n_cov, n_hidden, n_horizons)

    return pl.pallas_call(
        kernel,
        out_shape=out_shape,
        grid=grid,
        in_specs=in_specs,
        out_specs=out_specs,
        compiler_params=pltpu.CompilerParams(
            dimension_semantics=("parallel",),   # batch axis -> megacore sharding
            vmem_limit_bytes=vmem_limit),
    )(*operands)


# --------------------------- Module wrapper ----------------------------------

class GlobalMLPPallas:
    def __init__(self, key, state_size, n_future_covariates, n_horizons,
                 local_context_size, global_context_size, n_global_layers):
        # TODO(synk): n_global_layers == 1 (single linear layer) is not wired up
        # for the fused split-K + split-N layout; the module is always >=2 deep
        # in practice.
        assert n_global_layers >= 2
        self.state_size = state_size
        self.n_future_covariates = n_future_covariates
        self.n_horizons = n_horizons
        self.local_context_size = local_context_size
        self.global_context_size = global_context_size
        self.in_size = state_size + n_future_covariates * n_horizons
        out_size = n_horizons * local_context_size + global_context_size

        # Layer output widths exactly as the PyTorch module computes them.
        layer_sizes = [int(s) for s in
                       np.linspace(self.in_size, out_size, n_global_layers, dtype=int)]

        # Deterministic synthetic parameters (f32 masters kept for the reference).
        self.w_f32, self.b_f32 = [], []
        prev = self.in_size
        for size in layer_sizes:
            key, wk, bk = jax.random.split(key, 3)
            self.w_f32.append(jax.random.normal(wk, (prev, size), jnp.float32) * 0.1)
            self.b_f32.append(jax.random.normal(bk, (1, size), jnp.float32) * 0.1)
            prev = size

        # Kernel-side parameters: bf16 MXU operands, biases stay f32.
        w_bf16 = [w.astype(jnp.bfloat16) for w in self.w_f32]

        # Layer 0 split by rows (split-K) so the input concat is never materialized.
        piece_rows = [state_size] + [n_horizons] * n_future_covariates
        offs = np.cumsum([0] + piece_rows)
        self.w0_pieces = [w_bf16[0][offs[j]:offs[j + 1], :]
                          for j in range(len(piece_rows))]
        self.b0 = self.b_f32[0]

        # Hidden tail layers 1..L-2.
        self.hidden_w = w_bf16[1:-1]
        self.hidden_b = self.b_f32[1:-1]

        # Final layer split by columns (split-N): global piece + per-horizon local
        # pieces stacked (H, K, L) so the kernel can write (H, B, L) directly.
        w_last, b_last = w_bf16[-1], self.b_f32[-1]
        G, H, L = global_context_size, n_horizons, local_context_size
        self.wg = w_last[:, :G]
        self.bg = b_last[:, :G]
        self.wl = jnp.transpose(w_last[:, G:].reshape(-1, H, L), (1, 0, 2))
        self.bl = jnp.transpose(b_last[:, G:].reshape(1, H, L), (1, 0, 2))

    def __call__(self, state, future_covariates, out_dtype=jnp.float32):
        return global_mlp_forward_pallas(
            state, list(future_covariates), self.w0_pieces, self.b0,
            self.hidden_w, self.hidden_b, self.wg, self.bg, self.wl, self.bl,
            n_horizons=self.n_horizons, out_dtype=out_dtype)

    # ---- pure-JAX references -------------------------------------------------

    def reference_bf16(self, state, future_covariates):
        """Same numerics as the kernel: split-K layer 0, bf16 MXU operands with
        f32 accumulation, split-N final layer, f32 epilogue."""
        covs = [c[:, :self.n_horizons] for c in future_covariates]
        pieces = [state, *covs]
        h = jnp.dot(pieces[0].astype(jnp.bfloat16), self.w0_pieces[0],
                    preferred_element_type=jnp.float32)
        for p, wp in zip(pieces[1:], self.w0_pieces[1:]):
            h = h + jnp.dot(p.astype(jnp.bfloat16), wp,
                            preferred_element_type=jnp.float32)
        h = jnp.maximum(h + self.b0, 0.0)
        for w, b in zip(self.hidden_w, self.hidden_b):
            h = jnp.maximum(jnp.dot(h.astype(jnp.bfloat16), w,
                                    preferred_element_type=jnp.float32) + b, 0.0)
        h_b = h.astype(jnp.bfloat16)
        g = jnp.dot(h_b, self.wg, preferred_element_type=jnp.float32) + self.bg
        l = jnp.einsum('bk,hkl->hbl', h_b, self.wl,
                       preferred_element_type=jnp.float32) + self.bl
        return g, l

    def reference_f32(self, state, future_covariates):
        """Independent full-f32 reference of the original PyTorch module."""
        covs = [c[:, :self.n_horizons] for c in future_covariates]
        h = jnp.concatenate([state, *covs], axis=1)
        for i, (w, b) in enumerate(zip(self.w_f32, self.b_f32)):
            h = h @ w + b
            if i < len(self.w_f32) - 1:
                h = jnp.maximum(h, 0.0)
        batch = h.shape[0]
        g = h[:, :self.global_context_size]
        l = h[:, self.global_context_size:].reshape(batch, -1, self.local_context_size)
        return g, jnp.transpose(l, (1, 0, 2))


# --------------------------------- main --------------------------------------

if __name__ == "__main__":
    state_size = 16
    n_future_covariates = 2
    n_horizons = 8
    local_context_size = 8
    global_context_size = 16
    n_global_layers = 3

    key = jax.random.PRNGKey(0)
    key, k_mod = jax.random.split(key)
    module = GlobalMLPPallas(k_mod, state_size, n_future_covariates, n_horizons,
                             local_context_size, global_context_size,
                             n_global_layers)

    # batch=8: single-block path; batch=40: grid>1 + ragged last batch tile.
    for batch in (8, 40):
        key, k_state, k_c0, k_c1 = jax.random.split(key, 4)
        state = jax.random.normal(k_state, (batch, state_size), jnp.float32)
        # Covariates wider than n_horizons exercise the fused [:, :n_horizons] slice.
        future_covariates = [
            jax.random.normal(k_c0, (batch, n_horizons + 2), jnp.float32),
            jax.random.normal(k_c1, (batch, n_horizons + 2), jnp.float32),
        ]

        global_ctx, local_ctx = module(state, future_covariates)
        jax.block_until_ready((global_ctx, local_ctx))

        # Shape checks (transpose to (H, B, L) is now fused into the kernel).
        assert global_ctx.shape == (batch, global_context_size)
        assert local_ctx.shape == (n_horizons, batch, local_context_size)

        # Structural check against a reference with identical numerics.
        ref_g, ref_l = module.reference_bf16(state, future_covariates)
        np.testing.assert_allclose(np.asarray(global_ctx), np.asarray(ref_g),
                                   rtol=1e-3, atol=1e-3)
        np.testing.assert_allclose(np.asarray(local_ctx), np.asarray(ref_l),
                                   rtol=1e-3, atol=1e-3)

        # Sanity check against the full-f32 reference (tolerance loosened for
        # the bf16 MXU operands).
        ref_g32, ref_l32 = module.reference_f32(state, future_covariates)
        np.testing.assert_allclose(np.asarray(global_ctx), np.asarray(ref_g32),
                                   rtol=5e-2, atol=5e-2)
        np.testing.assert_allclose(np.asarray(local_ctx), np.asarray(ref_l32),
                                   rtol=5e-2, atol=5e-2)

    print("KERNEL_OK")
</pallas_src>

<mosaic_0001>
module attributes {stable_mosaic.version = 11 : i64} {
  func.func @kernel(%arg0: i32, %arg1: memref<8x16xf32, #tpu.memory_space<vmem>>, %arg2: memref<8x10xf32, #tpu.memory_space<vmem>>, %arg3: memref<8x10xf32, #tpu.memory_space<vmem>>, %arg4: memref<16x32xbf16, #tpu.memory_space<vmem>>, %arg5: memref<8x32xbf16, #tpu.memory_space<vmem>>, %arg6: memref<8x32xbf16, #tpu.memory_space<vmem>>, %arg7: memref<1x32xf32, #tpu.memory_space<vmem>>, %arg8: memref<32x56xbf16, #tpu.memory_space<vmem>>, %arg9: memref<1x56xf32, #tpu.memory_space<vmem>>, %arg10: memref<56x16xbf16, #tpu.memory_space<vmem>>, %arg11: memref<1x16xf32, #tpu.memory_space<vmem>>, %arg12: memref<8x56x8xbf16, #tpu.memory_space<vmem>>, %arg13: memref<8x1x8xf32, #tpu.memory_space<vmem>>, %arg14: memref<8x16xf32, #tpu.memory_space<vmem>>, %arg15: memref<8x8x8xf32, #tpu.memory_space<vmem>>) attributes {dimension_semantics = [#tpu.dimension_semantics<parallel>], iteration_bounds = array<i64: 1>, scalar_prefetch = 0 : i64, scratch_operands = 0 : i64, tpu.core_type = #tpu.core_type<tc>, window_params = [{transform_indices = @transform_0, window_bounds = array<i64: 8, 16>}, {transform_indices = @transform_1, window_bounds = array<i64: 8, 10>}, {transform_indices = @transform_2, window_bounds = array<i64: 8, 10>}, {pipeline_mode = #tpu.pipeline_mode<synchronous>, transform_indices = @transform_3, window_bounds = array<i64: 16, 32>}, {pipeline_mode = #tpu.pipeline_mode<synchronous>, transform_indices = @transform_4, window_bounds = array<i64: 8, 32>}, {pipeline_mode = #tpu.pipeline_mode<synchronous>, transform_indices = @transform_5, window_bounds = array<i64: 8, 32>}, {pipeline_mode = #tpu.pipeline_mode<synchronous>, transform_indices = @transform_6, window_bounds = array<i64: 1, 32>}, {pipeline_mode = #tpu.pipeline_mode<synchronous>, transform_indices = @transform_7, window_bounds = array<i64: 32, 56>}, {pipeline_mode = #tpu.pipeline_mode<synchronous>, transform_indices = @transform_8, window_bounds = array<i64: 1, 56>}, {pipeline_mode = #tpu.pipeline_mode<synchronous>, transform_indices = @transform_9, window_bounds = array<i64: 56, 16>}, {pipeline_mode = #tpu.pipeline_mode<synchronous>, transform_indices = @transform_10, window_bounds = array<i64: 1, 16>}, {pipeline_mode = #tpu.pipeline_mode<synchronous>, transform_indices = @transform_11, window_bounds = array<i64: 8, 56, 8>}, {pipeline_mode = #tpu.pipeline_mode<synchronous>, transform_indices = @transform_12, window_bounds = array<i64: 8, 1, 8>}, {transform_indices = @transform_13, window_bounds = array<i64: 8, 16>}, {transform_indices = @transform_14, window_bounds = array<i64: 8, 8, 8>}]} {
    %c0 = arith.constant 0 : index
    %c0_0 = arith.constant 0 : index
    %0 = vector.load %arg1[%c0, %c0_0] : memref<8x16xf32, #tpu.memory_space<vmem>>, vector<8x16xf32>
    %1 = arith.truncf %0 : vector<8x16xf32> to vector<8x16xbf16>
    %c0_1 = arith.constant 0 : index
    %c0_2 = arith.constant 0 : index
    %2 = vector.load %arg4[%c0_1, %c0_2] : memref<16x32xbf16, #tpu.memory_space<vmem>>, vector<16x32xbf16>
    %cst = arith.constant dense<0.000000e+00> : vector<8x32xf32>
    %3 = tpu.matmul %1, %2, %cst {dimension_numbers = #tpu.dot_dimension_numbers<[1], [0], [0], [1], [0, 0, 1, 1], [], []>} : vector<8x16xbf16>, vector<16x32xbf16>, vector<8x32xf32> -> vector<8x32xf32>
    %c0_3 = arith.constant 0 : index
    %c0_4 = arith.constant 0 : index
    %4 = vector.load %arg2[%c0_3, %c0_4] : memref<8x10xf32, #tpu.memory_space<vmem>>, vector<8x8xf32>
    %5 = arith.truncf %4 : vector<8x8xf32> to vector<8x8xbf16>
    %c0_5 = arith.constant 0 : index
    %c0_6 = arith.constant 0 : index
    %6 = vector.load %arg5[%c0_5, %c0_6] : memref<8x32xbf16, #tpu.memory_space<vmem>>, vector<8x32xbf16>
    %cst_7 = arith.constant dense<0.000000e+00> : vector<8x32xf32>
    %7 = tpu.matmul %5, %6, %cst_7 {dimension_numbers = #tpu.dot_dimension_numbers<[1], [0], [0], [1], [0, 0, 1, 1], [], []>} : vector<8x8xbf16>, vector<8x32xbf16>, vector<8x32xf32> -> vector<8x32xf32>
    %8 = arith.addf %3, %7 : vector<8x32xf32>
    %c0_8 = arith.constant 0 : index
    %c0_9 = arith.constant 0 : index
    %9 = vector.load %arg3[%c0_8, %c0_9] : memref<8x10xf32, #tpu.memory_space<vmem>>, vector<8x8xf32>
    %10 = arith.truncf %9 : vector<8x8xf32> to vector<8x8xbf16>
    %c0_10 = arith.constant 0 : index
    %c0_11 = arith.constant 0 : index
    %11 = vector.load %arg6[%c0_10, %c0_11] : memref<8x32xbf16, #tpu.memory_space<vmem>>, vector<8x32xbf16>
    %cst_12 = arith.constant dense<0.000000e+00> : vector<8x32xf32>
    %12 = tpu.matmul %10, %11, %cst_12 {dimension_numbers = #tpu.dot_dimension_numbers<[1], [0], [0], [1], [0, 0, 1, 1], [], []>} : vector<8x8xbf16>, vector<8x32xbf16>, vector<8x32xf32> -> vector<8x32xf32>
    %13 = arith.addf %8, %12 : vector<8x32xf32>
    %c0_13 = arith.constant 0 : index
    %c0_14 = arith.constant 0 : index
    %14 = vector.load %arg7[%c0_13, %c0_14] : memref<1x32xf32, #tpu.memory_space<vmem>>, vector<1x32xf32>
    %15 = vector.broadcast %14 : vector<1x32xf32> to vector<8x32xf32>
    %16 = arith.addf %13, %15 : vector<8x32xf32>
    %cst_15 = arith.constant 0.000000e+00 : f32
    %17 = vector.broadcast %cst_15 : f32 to vector<8x32xf32>
    %18 = arith.maximumf %16, %17 : vector<8x32xf32>
    %c0_16 = arith.constant 0 : index
    %c0_17 = arith.constant 0 : index
    %19 = vector.load %arg8[%c0_16, %c0_17] : memref<32x56xbf16, #tpu.memory_space<vmem>>, vector<32x56xbf16>
    %c0_18 = arith.constant 0 : index
    %c0_19 = arith.constant 0 : index
    %20 = vector.load %arg9[%c0_18, %c0_19] : memref<1x56xf32, #tpu.memory_space<vmem>>, vector<1x56xf32>
    %21 = arith.truncf %18 : vector<8x32xf32> to vector<8x32xbf16>
    %cst_20 = arith.constant dense<0.000000e+00> : vector<8x56xf32>
    %22 = tpu.matmul %21, %19, %cst_20 {dimension_numbers = #tpu.dot_dimension_numbers<[1], [0], [0], [1], [0, 0, 1, 1], [], []>} : vector<8x32xbf16>, vector<32x56xbf16>, vector<8x56xf32> -> vector<8x56xf32>
    %23 = vector.broadcast %20 : vector<1x56xf32> to vector<8x56xf32>
    %24 = arith.addf %22, %23 : vector<8x56xf32>
    %cst_21 = arith.constant 0.000000e+00 : f32
    %25 = vector.broadcast %cst_21 : f32 to vector<8x56xf32>
    %26 = arith.maximumf %24, %25 : vector<8x56xf32>
    %27 = arith.truncf %26 : vector<8x56xf32> to vector<8x56xbf16>
    %c0_22 = arith.constant 0 : index
    %c0_23 = arith.constant 0 : index
    %28 = vector.load %arg10[%c0_22, %c0_23] : memref<56x16xbf16, #tpu.memory_space<vmem>>, vector<56x16xbf16>
    %cst_24 = arith.constant dense<0.000000e+00> : vector<8x16xf32>
    %29 = tpu.matmul %27, %28, %cst_24 {dimension_numbers = #tpu.dot_dimension_numbers<[1], [0], [0], [1], [0, 0, 1, 1], [], []>} : vector<8x56xbf16>, vector<56x16xbf16>, vector<8x16xf32> -> vector<8x16xf32>
    %c0_25 = arith.constant 0 : index
    %c0_26 = arith.constant 0 : index
    %30 = vector.load %arg11[%c0_25, %c0_26] : memref<1x16xf32, #tpu.memory_space<vmem>>, vector<1x16xf32>
    %31 = vector.broadcast %30 : vector<1x16xf32> to vector<8x16xf32>
    %32 = arith.addf %29, %31 : vector<8x16xf32>
    %c0_27 = arith.constant 0 : index
    %c0_28 = arith.constant 0 : index
    %33 = vector.load %arg14[%c0_27, %c0_28] : memref<8x16xf32, #tpu.memory_space<vmem>>, vector<8x16xf32>
    tpu.vector_store %arg14[%c0_27, %c0_28], %32 {strides = array<i32>} : memref<8x16xf32, #tpu.memory_space<vmem>>, vector<8x16xf32>,
    %c0_29 = arith.constant 0 : index
    %c0_30 = arith.constant 0 : index
    %c0_31 = arith.constant 0 : index
    %34 = vector.load %arg12[%c0_29, %c0_30, %c0_31] : memref<8x56x8xbf16, #tpu.memory_space<vmem>>, vector<1x56x8xbf16>
    %35 = vector.shape_cast %34 : vector<1x56x8xbf16> to vector<56x8xbf16>
    %cst_32 = arith.constant dense<0.000000e+00> : vector<8x8xf32>
    %36 = tpu.matmul %27, %35, %cst_32 {dimension_numbers = #tpu.dot_dimension_numbers<[1], [0], [0], [1], [0, 0, 1, 1], [], []>} : vector<8x56xbf16>, vector<56x8xbf16>, vector<8x8xf32> -> vector<8x8xf32>
    %c0_33 = arith.constant 0 : index
    %c0_34 = arith.constant 0 : index
    %c0_35 = arith.constant 0 : index
    %37 = vector.load %arg13[%c0_33, %c0_34, %c0_35] : memref<8x1x8xf32, #tpu.memory_space<vmem>>, vector<1x1x8xf32>
    %38 = vector.shape_cast %37 : vector<1x1x8xf32> to vector<1x8xf32>
    %39 = vector.broadcast %38 : vector<1x8xf32> to vector<8x8xf32>
    %40 = arith.addf %36, %39 : vector<8x8xf32>
    %c0_36 = arith.constant 0 : index
    %c0_37 = arith.constant 0 : index
    %c0_38 = arith.constant 0 : index
    %41 = vector.load %arg15[%c0_36, %c0_37, %c0_38] : memref<8x8x8xf32, #tpu.memory_space<vmem>>, vector<1x8x8xf32>
    %42 = vector.shape_cast %41 : vector<1x8x8xf32> to vector<8x8xf32>
    %43 = vector.shape_cast %40 : vector<8x8xf32> to vector<1x8x8xf32>
    tpu.vector_store %arg15[%c0_36, %c0_37, %c0_38], %43 {strides = array<i32>} : memref<8x8x8xf32, #tpu.memory_space<vmem>>, vector<1x8x8xf32>,
    %c1 = arith.constant 1 : index
    %c0_39 = arith.constant 0 : index
    %c0_40 = arith.constant 0 : index
    %44 = vector.load %arg12[%c1, %c0_39, %c0_40] : memref<8x56x8xbf16, #tpu.memory_space<vmem>>, vector<1x56x8xbf16>
    %45 = vector.shape_cast %44 : vector<1x56x8xbf16> to vector<56x8xbf16>
    %cst_41 = arith.constant dense<0.000000e+00> : vector<8x8xf32>
    %46 = tpu.matmul %27, %45, %cst_41 {dimension_numbers = #tpu.dot_dimension_numbers<[1], [0], [0], [1], [0, 0, 1, 1], [], []>} : vector<8x56xbf16>, vector<56x8xbf16>, vector<8x8xf32> -> vector<8x8xf32>
    %c1_42 = arith.constant 1 : index
    %c0_43 = arith.constant 0 : index
    %c0_44 = arith.constant 0 : index
    %47 = vector.load %arg13[%c1_42, %c0_43, %c0_44] : memref<8x1x8xf32, #tpu.memory_space<vmem>>, vector<1x1x8xf32>
    %48 = vector.shape_cast %47 : vector<1x1x8xf32> to vector<1x8xf32>
    %49 = vector.broadcast %48 : vector<1x8xf32> to vector<8x8xf32>
    %50 = arith.addf %46, %49 : vector<8x8xf32>
    %c1_45 = arith.constant 1 : index
    %c0_46 = arith.constant 0 : index
    %c0_47 = arith.constant 0 : index
    %51 = vector.load %arg15[%c1_45, %c0_46, %c0_47] : memref<8x8x8xf32, #tpu.memory_space<vmem>>, vector<1x8x8xf32>
    %52 = vector.shape_cast %51 : vector<1x8x8xf32> to vector<8x8xf32>
    %53 = vector.shape_cast %50 : vector<8x8xf32> to vector<1x8x8xf32>
    tpu.vector_store %arg15[%c1_45, %c0_46, %c0_47], %53 {strides = array<i32>} : memref<8x8x8xf32, #tpu.memory_space<vmem>>, vector<1x8x8xf32>,
    %c2 = arith.constant 2 : index
    %c0_48 = arith.constant 0 : index
    %c0_49 = arith.constant 0 : index
    %54 = vector.load %arg12[%c2, %c0_48, %c0_49] : memref<8x56x8xbf16, #tpu.memory_space<vmem>>, vector<1x56x8xbf16>
    %55 = vector.shape_cast %54 : vector<1x56x8xbf16> to vector<56x8xbf16>
    %cst_50 = arith.constant dense<0.000000e+00> : vector<8x8xf32>
    %56 = tpu.matmul %27, %55, %cst_50 {dimension_numbers = #tpu.dot_dimension_numbers<[1], [0], [0], [1], [0, 0, 1, 1], [], []>} : vector<8x56xbf16>, vector<56x8xbf16>, vector<8x8xf32> -> vector<8x8xf32>
    %c2_51 = arith.constant 2 : index
    %c0_52 = arith.constant 0 : index
    %c0_53 = arith.constant 0 : index
    %57 = vector.load %arg13[%c2_51, %c0_52, %c0_53] : memref<8x1x8xf32, #tpu.memory_space<vmem>>, vector<1x1x8xf32>
    %58 = vector.shape_cast %57 : vector<1x1x8xf32> to vector<1x8xf32>
    %59 = vector.broadcast %58 : vector<1x8xf32> to vector<8x8xf32>
    %60 = arith.addf %56, %59 : vector<8x8xf32>
    %c2_54 = arith.constant 2 : index
    %c0_55 = arith.constant 0 : index
    %c0_56 = arith.constant 0 : index
    %61 = vector.load %arg15[%c2_54, %c0_55, %c0_56] : memref<8x8x8xf32, #tpu.memory_space<vmem>>, vector<1x8x8xf32>
    %62 = vector.shape_cast %61 : vector<1x8x8xf32> to vector<8x8xf32>
    %63 = vector.shape_cast %60 : vector<8x8xf32> to vector<1x8x8xf32>
    tpu.vector_store %arg15[%c2_54, %c0_55, %c0_56], %63 {strides = array<i32>} : memref<8x8x8xf32, #tpu.memory_space<vmem>>, vector<1x8x8xf32>,
    %c3 = arith.constant 3 : index
    %c0_57 = arith.constant 0 : index
    %c0_58 = arith.constant 0 : index
    %64 = vector.load %arg12[%c3, %c0_57, %c0_58] : memref<8x56x8xbf16, #tpu.memory_space<vmem>>, vector<1x56x8xbf16>
    %65 = vector.shape_cast %64 : vector<1x56x8xbf16> to vector<56x8xbf16>
    %cst_59 = arith.constant dense<0.000000e+00> : vector<8x8xf32>
    %66 = tpu.matmul %27, %65, %cst_59 {dimension_numbers = #tpu.dot_dimension_numbers<[1], [0], [0], [1], [0, 0, 1, 1], [], []>} : vector<8x56xbf16>, vector<56x8xbf16>, vector<8x8xf32> -> vector<8x8xf32>
    %c3_60 = arith.constant 3 : index
    %c0_61 = arith.constant 0 : index
    %c0_62 = arith.constant 0 : index
    %67 = vector.load %arg13[%c3_60, %c0_61, %c0_62] : memref<8x1x8xf32, #tpu.memory_space<vmem>>, vector<1x1x8xf32>
    %68 = vector.shape_cast %67 : vector<1x1x8xf32> to vector<1x8xf32>
    %69 = vector.broadcast %68 : vector<1x8xf32> to vector<8x8xf32>
    %70 = arith.addf %66, %69 : vector<8x8xf32>
    %c3_63 = arith.constant 3 : index
    %c0_64 = arith.constant 0 : index
    %c0_65 = arith.constant 0 : index
    %71 = vector.load %arg15[%c3_63, %c0_64, %c0_65] : memref<8x8x8xf32, #tpu.memory_space<vmem>>, vector<1x8x8xf32>
    %72 = vector.shape_cast %71 : vector<1x8x8xf32> to vector<8x8xf32>
    %73 = vector.shape_cast %70 : vector<8x8xf32> to vector<1x8x8xf32>
    tpu.vector_store %arg15[%c3_63, %c0_64, %c0_65], %73 {strides = array<i32>} : memref<8x8x8xf32, #tpu.memory_space<vmem>>, vector<1x8x8xf32>,
    %c4 = arith.constant 4 : index
    %c0_66 = arith.constant 0 : index
    %c0_67 = arith.constant 0 : index
    %74 = vector.load %arg12[%c4, %c0_66, %c0_67] : memref<8x56x8xbf16, #tpu.memory_space<vmem>>, vector<1x56x8xbf16>
    %75 = vector.shape_cast %74 : vector<1x56x8xbf16> to vector<56x8xbf16>
    %cst_68 = arith.constant dense<0.000000e+00> : vector<8x8xf32>
    %76 = tpu.matmul %27, %75, %cst_68 {dimension_numbers = #tpu.dot_dimension_numbers<[1], [0], [0], [1], [0, 0, 1, 1], [], []>} : vector<8x56xbf16>, vector<56x8xbf16>, vector<8x8xf32> -> vector<8x8xf32>
    %c4_69 = arith.constant 4 : index
    %c0_70 = arith.constant 0 : index
    %c0_71 = arith.constant 0 : index
    %77 = vector.load %arg13[%c4_69, %c0_70, %c0_71] : memref<8x1x8xf32, #tpu.memory_space<vmem>>, vector<1x1x8xf32>
    %78 = vector.shape_cast %77 : vector<1x1x8xf32> to vector<1x8xf32>
    %79 = vector.broadcast %78 : vector<1x8xf32> to vector<8x8xf32>
    %80 = arith.addf %76, %79 : vector<8x8xf32>
    %c4_72 = arith.constant 4 : index
    %c0_73 = arith.constant 0 : index
    %c0_74 = arith.constant 0 : index
    %81 = vector.load %arg15[%c4_72, %c0_73, %c0_74] : memref<8x8x8xf32, #tpu.memory_space<vmem>>, vector<1x8x8xf32>
    %82 = vector.shape_cast %81 : vector<1x8x8xf32> to vector<8x8xf32>
    %83 = vector.shape_cast %80 : vector<8x8xf32> to vector<1x8x8xf32>
    tpu.vector_store %arg15[%c4_72, %c0_73, %c0_74], %83 {strides = array<i32>} : memref<8x8x8xf32, #tpu.memory_space<vmem>>, vector<1x8x8xf32>,
    %c5 = arith.constant 5 : index
    %c0_75 = arith.constant 0 : index
    %c0_76 = arith.constant 0 : index
    %84 = vector.load %arg12[%c5, %c0_75, %c0_76] : memref<8x56x8xbf16, #tpu.memory_space<vmem>>, vector<1x56x8xbf16>
    %85 = vector.shape_cast %84 : vector<1x56x8xbf16> to vector<56x8xbf16>
    %cst_77 = arith.constant dense<0.000000e+00> : vector<8x8xf32>
    %86 = tpu.matmul %27, %85, %cst_77 {dimension_numbers = #tpu.dot_dimension_numbers<[1], [0], [0], [1], [0, 0, 1, 1], [], []>} : vector<8x56xbf16>, vector<56x8xbf16>, vector<8x8xf32> -> vector<8x8xf32>
    %c5_78 = arith.constant 5 : index
    %c0_79 = arith.constant 0 : index
    %c0_80 = arith.constant 0 : index
    %87 = vector.load %arg13[%c5_78, %c0_79, %c0_80] : memref<8x1x8xf32, #tpu.memory_space<vmem>>, vector<1x1x8xf32>
    %88 = vector.shape_cast %87 : vector<1x1x8xf32> to vector<1x8xf32>
    %89 = vector.broadcast %88 : vector<1x8xf32> to vector<8x8xf32>
    %90 = arith.addf %86, %89 : vector<8x8xf32>
    %c5_81 = arith.constant 5 : index
    %c0_82 = arith.constant 0 : index
    %c0_83 = arith.constant 0 : index
    %91 = vector.load %arg15[%c5_81, %c0_82, %c0_83] : memref<8x8x8xf32, #tpu.memory_space<vmem>>, vector<1x8x8xf32>
    %92 = vector.shape_cast %91 : vector<1x8x8xf32> to vector<8x8xf32>
    %93 = vector.shape_cast %90 : vector<8x8xf32> to vector<1x8x8xf32>
    tpu.vector_store %arg15[%c5_81, %c0_82, %c0_83], %93 {strides = array<i32>} : memref<8x8x8xf32, #tpu.memory_space<vmem>>, vector<1x8x8xf32>,
    %c6 = arith.constant 6 : index
    %c0_84 = arith.constant 0 : index
    %c0_85 = arith.constant 0 : index
    %94 = vector.load %arg12[%c6, %c0_84, %c0_85] : memref<8x56x8xbf16, #tpu.memory_space<vmem>>, vector<1x56x8xbf16>
    %95 = vector.shape_cast %94 : vector<1x56x8xbf16> to vector<56x8xbf16>
    %cst_86 = arith.constant dense<0.000000e+00> : vector<8x8xf32>
    %96 = tpu.matmul %27, %95, %cst_86 {dimension_numbers = #tpu.dot_dimension_numbers<[1], [0], [0], [1], [0, 0, 1, 1], [], []>} : vector<8x56xbf16>, vector<56x8xbf16>, vector<8x8xf32> -> vector<8x8xf32>
    %c6_87 = arith.constant 6 : index
    %c0_88 = arith.constant 0 : index
    %c0_89 = arith.constant 0 : index
    %97 = vector.load %arg13[%c6_87, %c0_88, %c0_89] : memref<8x1x8xf32, #tpu.memory_space<vmem>>, vector<1x1x8xf32>
    %98 = vector.shape_cast %97 : vector<1x1x8xf32> to vector<1x8xf32>
    %99 = vector.broadcast %98 : vector<1x8xf32> to vector<8x8xf32>
    %100 = arith.addf %96, %99 : vector<8x8xf32>
    %c6_90 = arith.constant 6 : index
    %c0_91 = arith.constant 0 : index
    %c0_92 = arith.constant 0 : index
    %101 = vector.load %arg15[%c6_90, %c0_91, %c0_92] : memref<8x8x8xf32, #tpu.memory_space<vmem>>, vector<1x8x8xf32>
    %102 = vector.shape_cast %101 : vector<1x8x8xf32> to vector<8x8xf32>
    %103 = vector.shape_cast %100 : vector<8x8xf32> to vector<1x8x8xf32>
    tpu.vector_store %arg15[%c6_90, %c0_91, %c0_92], %103 {strides = array<i32>} : memref<8x8x8xf32, #tpu.memory_space<vmem>>, vector<1x8x8xf32>,
    %c7 = arith.constant 7 : index
    %c0_93 = arith.constant 0 : index
    %c0_94 = arith.constant 0 : index
    %104 = vector.load %arg12[%c7, %c0_93, %c0_94] : memref<8x56x8xbf16, #tpu.memory_space<vmem>>, vector<1x56x8xbf16>
    %105 = vector.shape_cast %104 : vector<1x56x8xbf16> to vector<56x8xbf16>
    %cst_95 = arith.constant dense<0.000000e+00> : vector<8x8xf32>
    %106 = tpu.matmul %27, %105, %cst_95 {dimension_numbers = #tpu.dot_dimension_numbers<[1], [0], [0], [1], [0, 0, 1, 1], [], []>} : vector<8x56xbf16>, vector<56x8xbf16>, vector<8x8xf32> -> vector<8x8xf32>
    %c7_96 = arith.constant 7 : index
    %c0_97 = arith.constant 0 : index
    %c0_98 = arith.constant 0 : index
    %107 = vector.load %arg13[%c7_96, %c0_97, %c0_98] : memref<8x1x8xf32, #tpu.memory_space<vmem>>, vector<1x1x8xf32>
    %108 = vector.shape_cast %107 : vector<1x1x8xf32> to vector<1x8xf32>
    %109 = vector.broadcast %108 : vector<1x8xf32> to vector<8x8xf32>
    %110 = arith.addf %106, %109 : vector<8x8xf32>
    %c7_99 = arith.constant 7 : index
    %c0_100 = arith.constant 0 : index
    %c0_101 = arith.constant 0 : index
    %111 = vector.load %arg15[%c7_99, %c0_100, %c0_101] : memref<8x8x8xf32, #tpu.memory_space<vmem>>, vector<1x8x8xf32>
    %112 = vector.shape_cast %111 : vector<1x8x8xf32> to vector<8x8xf32>
    %113 = vector.shape_cast %110 : vector<8x8xf32> to vector<1x8x8xf32>
    tpu.vector_store %arg15[%c7_99, %c0_100, %c0_101], %113 {strides = array<i32>} : memref<8x8x8xf32, #tpu.memory_space<vmem>>, vector<1x8x8xf32>,
    return
  }
  func.func @transform_0(%arg0: i32) -> (i32, i32) {
    %c0_i32 = arith.constant 0 : i32
    %c0_i32_0 = arith.constant 0 : i32
    return %arg0, %c0_i32 : i32, i32
  }
  func.func @transform_1(%arg0: i32) -> (i32, i32) {
    %c0_i32 = arith.constant 0 : i32
    %c0_i32_0 = arith.constant 0 : i32
    return %arg0, %c0_i32 : i32, i32
  }
  func.func @transform_2(%arg0: i32) -> (i32, i32) {
    %c0_i32 = arith.constant 0 : i32
    %c0_i32_0 = arith.constant 0 : i32
    return %arg0, %c0_i32 : i32, i32
  }
  func.func @transform_3(%arg0: i32) -> (i32, i32) {
    %c0_i32 = arith.constant 0 : i32
    %c0_i32_0 = arith.constant 0 : i32
    %c0_i32_1 = arith.constant 0 : i32
    return %c0_i32, %c0_i32_0 : i32, i32
  }
  func.func @transform_4(%arg0: i32) -> (i32, i32) {
    %c0_i32 = arith.constant 0 : i32
    %c0_i32_0 = arith.constant 0 : i32
    %c0_i32_1 = arith.constant 0 : i32
    return %c0_i32, %c0_i32_0 : i32, i32
  }
  func.func @transform_5(%arg0: i32) -> (i32, i32) {
    %c0_i32 = arith.constant 0 : i32
    %c0_i32_0 = arith.constant 0 : i32
    %c0_i32_1 = arith.constant 0 : i32
    return %c0_i32, %c0_i32_0 : i32, i32
  }
  func.func @transform_6(%arg0: i32) -> (i32, i32) {
    %c0_i32 = arith.constant 0 : i32
    %c0_i32_0 = arith.constant 0 : i32
    %c0_i32_1 = arith.constant 0 : i32
    return %c0_i32, %c0_i32_0 : i32, i32
  }
  func.func @transform_7(%arg0: i32) -> (i32, i32) {
    %c0_i32 = arith.constant 0 : i32
    %c0_i32_0 = arith.constant 0 : i32
    %c0_i32_1 = arith.constant 0 : i32
    return %c0_i32, %c0_i32_0 : i32, i32
  }
  func.func @transform_8(%arg0: i32) -> (i32, i32) {
    %c0_i32 = arith.constant 0 : i32
    %c0_i32_0 = arith.constant 0 : i32
    %c0_i32_1 = arith.constant 0 : i32
    return %c0_i32, %c0_i32_0 : i32, i32
  }
  func.func @transform_9(%arg0: i32) -> (i32, i32) {
    %c0_i32 = arith.constant 0 : i32
    %c0_i32_0 = arith.constant 0 : i32
    %c0_i32_1 = arith.constant 0 : i32
    return %c0_i32, %c0_i32_0 : i32, i32
  }
  func.func @transform_10(%arg0: i32) -> (i32, i32) {
    %c0_i32 = arith.constant 0 : i32
    %c0_i32_0 = arith.constant 0 : i32
    %c0_i32_1 = arith.constant 0 : i32
    return %c0_i32, %c0_i32_0 : i32, i32
  }
  func.func @transform_11(%arg0: i32) -> (i32, i32, i32) {
    %c0_i32 = arith.constant 0 : i32
    %c0_i32_0 = arith.constant 0 : i32
    %c0_i32_1 = arith.constant 0 : i32
    %c0_i32_2 = arith.constant 0 : i32
    return %c0_i32, %c0_i32_0, %c0_i32_1 : i32, i32, i32
  }
  func.func @transform_12(%arg0: i32) -> (i32, i32, i32) {
    %c0_i32 = arith.constant 0 : i32
    %c0_i32_0 = arith.constant 0 : i32
    %c0_i32_1 = arith.constant 0 : i32
    %c0_i32_2 = arith.constant 0 : i32
    return %c0_i32, %c0_i32_0, %c0_i32_1 : i32, i32, i32
  }
  func.func @transform_13(%arg0: i32) -> (i32, i32) {
    %c0_i32 = arith.constant 0 : i32
    %c0_i32_0 = arith.constant 0 : i32
    return %arg0, %c0_i32 : i32, i32
  }
  func.func @transform_14(%arg0: i32) -> (i32, i32, i32) {
    %c0_i32 = arith.constant 0 : i32
    %c0_i32_0 = arith.constant 0 : i32
    %c0_i32_1 = arith.constant 0 : i32
    return %c0_i32, %arg0, %c0_i32_0 : i32, i32, i32
  }
}

</mosaic_0001>

<llo_original>
// kernel: tpu_custom_call.1
$region0: #{tpu_custom_call.1}
  #allocation0 [shape = 'u32[]', space=smem, size = 0x4, offset = 0x4, fixed_abs, tag = 'smem constant byte address 0x4 - core index']
  #allocation1 [shape = 'u32[144,128]{1,0:T(1,128)}', space=vmem, size = 0x12000, scoped, tag = 'internal scratch']
  %s0 = inlined_call_operand.vmem [shape: f32[8,16], index: 0, kind: input, shape index: {}]
  %s1 = inlined_call_operand.vmem [shape: f32[8,10], index: 1, kind: input, shape index: {}]
  %s2 = inlined_call_operand.vmem [shape: f32[8,10], index: 2, kind: input, shape index: {}]
  %s3 = inlined_call_operand.vmem [shape: bf16[16,32], index: 3, kind: input, shape index: {}]
  %s4 = inlined_call_operand.vmem [shape: bf16[8,32], index: 4, kind: input, shape index: {}]
  %s5 = inlined_call_operand.vmem [shape: bf16[8,32], index: 5, kind: input, shape index: {}]
  %s6 = inlined_call_operand.vmem [shape: f32[1,32], index: 6, kind: input, shape index: {}]
  %s7 = inlined_call_operand.vmem [shape: bf16[32,56], index: 7, kind: input, shape index: {}]
  %s8 = inlined_call_operand.vmem [shape: f32[1,56], index: 8, kind: input, shape index: {}]
  %s9 = inlined_call_operand.vmem [shape: bf16[56,16], index: 9, kind: input, shape index: {}]
  %s10 = inlined_call_operand.vmem [shape: f32[1,16], index: 10, kind: input, shape index: {}]
  %s11 = inlined_call_operand.vmem [shape: bf16[8,56,8], index: 11, kind: input, shape index: {}]
  %s12 = inlined_call_operand.vmem [shape: f32[8,1,8], index: 12, kind: input, shape index: {}]
  %s13 = inlined_call_operand.hbm [shape: f32[8,16], index: 13, kind: output, shape index: {0}]
  %s14 = inlined_call_operand.hbm [shape: f32[8,8,8], index: 14, kind: output, shape index: {1}]
  %15 = xla_tuple %s13, %s14
  %s16 = sld [smem:[#allocation0]]
  $region70: #{tpu_custom_call.1} parent=0
    _
  %s18 = ssub.s32 1, %s16
  %s19 = scalar_select 0, %s18, %s16
  $region1: #{tpu_custom_call.1} parent=0
    #allocation2 [shape = 'u8[4096]{0}', space=vmem, size = 0x1000, scoped, tag = 'output window, operand 0, single buffered']
    #allocation3 [shape = 's32[1]{0}', space=sflag, size = 0x4, scoped, tag = 'scoped memory for tpu_custom_call.1']
    #allocation4 [shape = 'u8[32768]{0}', space=vmem, size = 0x8000, scoped, tag = 'output window, operand 1, single buffered']
    #allocation5 [shape = 's32[1]{0}', space=sflag, size = 0x4, scoped, tag = 'scoped memory for tpu_custom_call.1']
    %20 = vsyncpa [#allocation3], 0
    %21 = vsyncpa [#allocation5], 0
    // Predicated region
    $region2: #{tpu_custom_call.1} parent=1 // pred_check
      _
    $region3: #{tpu_custom_call.1} parent=1 // pred_check_branch
      %23 = sbr.rel (0) target = $region5
    $region4: #{tpu_custom_call.1} parent=1 // pred_region
      _
    $region5: #{tpu_custom_call.1} parent=1 // pred_fallthru
      _
    // Predicated region
    $region6: #{tpu_custom_call.1} parent=1 // pred_check
      _
    $region7: #{tpu_custom_call.1} parent=1 // pred_check_branch
      %25 = sbr.rel (0) target = $region9
    $region8: #{tpu_custom_call.1} parent=1 // pred_region
      _
    $region9: #{tpu_custom_call.1} parent=1 // pred_fallthru
      _
    // Predicated region
    $region10: #{tpu_custom_call.1} parent=1 // pred_check
      _
    $region11: #{tpu_custom_call.1} parent=1 // pred_check_branch
      %27 = sbr.rel (0) target = $region13
    $region12: #{tpu_custom_call.1} parent=1 // pred_region
      _
    $region13: #{tpu_custom_call.1} parent=1 // pred_fallthru
      _
    // Predicated region
    $region14: #{tpu_custom_call.1} parent=1 // pred_check
      _
    $region15: #{tpu_custom_call.1} parent=1 // pred_check_branch
      %29 = sbr.rel (0) target = $region17
    $region16: #{tpu_custom_call.1} parent=1 // pred_region
      _
    $region17: #{tpu_custom_call.1} parent=1 // pred_fallthru
      _
    // Predicated region
    $region18: #{tpu_custom_call.1} parent=1 // pred_check
      _
    $region19: #{tpu_custom_call.1} parent=1 // pred_check_branch
      %31 = sbr.rel (0) target = $region21
    $region20: #{tpu_custom_call.1} parent=1 // pred_region
      _
    $region21: #{tpu_custom_call.1} parent=1 // pred_fallthru
      _
    // Predicated region
    $region22: #{tpu_custom_call.1} parent=1 // pred_check
      _
    $region23: #{tpu_custom_call.1} parent=1 // pred_check_branch
      %33 = sbr.rel (0) target = $region25
    $region24: #{tpu_custom_call.1} parent=1 // pred_region
      _
    $region25: #{tpu_custom_call.1} parent=1 // pred_fallthru
      _
    // Predicated region
    $region26: #{tpu_custom_call.1} parent=1 // pred_check
      _
    $region27: #{tpu_custom_call.1} parent=1 // pred_check_branch
      %35 = sbr.rel (0) target = $region29
    $region28: #{tpu_custom_call.1} parent=1 // pred_region
      _
    $region29: #{tpu_custom_call.1} parent=1 // pred_fallthru
      _
    // Predicated region
    $region30: #{tpu_custom_call.1} parent=1 // pred_check
      _
    $region31: #{tpu_custom_call.1} parent=1 // pred_check_branch
      %37 = sbr.rel (0) target = $region33
    $region32: #{tpu_custom_call.1} parent=1 // pred_region
      _
    $region33: #{tpu_custom_call.1} parent=1 // pred_fallthru
      _
    // Predicated region
    $region34: #{tpu_custom_call.1} parent=1 // pred_check
      _
    $region35: #{tpu_custom_call.1} parent=1 // pred_check_branch
      %39 = sbr.rel (0) target = $region37
    $region36: #{tpu_custom_call.1} parent=1 // pred_region
      _
    $region37: #{tpu_custom_call.1} parent=1 // pred_fallthru
      _
    // Predicated region
    $region38: #{tpu_custom_call.1} parent=1 // pred_check
      _
    $region39: #{tpu_custom_call.1} parent=1 // pred_check_branch
      %41 = sbr.rel (0) target = $region41
    $region40: #{tpu_custom_call.1} parent=1 // pred_region
      _
    $region41: #{tpu_custom_call.1} parent=1 // pred_fallthru
      _
    // Predicated region
    $region42: #{tpu_custom_call.1} parent=1 // pred_check
      _
    $region43: #{tpu_custom_call.1} parent=1 // pred_check_branch
      %43 = sbr.rel (0) target = $region45
    $region44: #{tpu_custom_call.1} parent=1 // pred_region
      _
    $region45: #{tpu_custom_call.1} parent=1 // pred_fallthru
      _
    // Predicated region
    $region46: #{tpu_custom_call.1} parent=1 // pred_check
      _
    $region47: #{tpu_custom_call.1} parent=1 // pred_check_branch
      %45 = sbr.rel (0) target = $region49
    $region48: #{tpu_custom_call.1} parent=1 // pred_region
      _
    $region49: #{tpu_custom_call.1} parent=1 // pred_fallthru
      _
    // Predicated region
    $region50: #{tpu_custom_call.1} parent=1 // pred_check
      _
    $region51: #{tpu_custom_call.1} parent=1 // pred_check_branch
      %47 = sbr.rel (0) target = $region53
    $region52: #{tpu_custom_call.1} parent=1 // pred_region
      _
    $region53: #{tpu_custom_call.1} parent=1 // pred_fallthru
      _
    %v49 = vld [vmem:[%s0] sm:$0xff]
    %v50 = vpack.c.bf16 %v49, %v49
    %v51 = vld [vmem:[%s3] sm:$0xf]
    %v52 = vld [vmem:[%s3 + $0x4] sm:$0xf]
    %v53 = vld [vmem:[%s1] sm:$0xff]
    %v54 = vpack.c.bf16 %v53, %v53
    %v55 = vld [vmem:[%s4] sm:$0xf]
    %vm56 = vcmask 64512
    %v58 = vsel %vm56, %v54, 0
    %vm60 = vcmask 1043456
    %v62 = vsel %vm60, %v55, 0
    %64 = vmatprep.subr.bf16.mxu0 0
    %65 = vmatpush1.bf16.msra.mxu0 0
    %66 = vmatprep.subr.bf16.mxu0 0
    %67 = vmatpush1.bf16.msra.mxu0 0
    %68 = vmatprep.subr.bf16.mxu0 0
    %69 = vmatpush1.bf16.msra.mxu0 0
    %70 = vmatprep.subr.bf16.mxu0 0
    %71 = vmatpush1.bf16.msra.mxu0 0
    %72 = vmatprep.subr.bf16.mxu0 0
    %73 = vmatpush1.bf16.msra.mxu0 0
    %74 = vmatprep.subr.bf16.mxu0 0
    %75 = vmatpush1.bf16.msra.mxu0 0
    %76 = vmatprep.subr.bf16.mxu0 0
    %77 = vmatpush1.bf16.msra.mxu0 0
    %78 = vmatprep.subr.bf16.mxu0 0
    %79 = vmatpush1.bf16.msra.mxu0 %v62
    %80 = vmatprep.subr.bf16.mxu0 0
    %81 = vmatpush2.bf16.msra.mxu0 0
    %82 = vmatprep.subr.bf16.mxu0 0
    %83 = vmatpush2.bf16.msra.mxu0 0
    %84 = vmatprep.subr.bf16.mxu0 0
    %85 = vmatpush2.bf16.msra.mxu0 0
    %86 = vmatprep.subr.bf16.mxu0 0
    %87 = vmatpush2.bf16.msra.mxu0 0
    %88 = vmatprep.subr.bf16.mxu0 0
    %89 = vmatpush2.bf16.msra.mxu0 0
    %90 = vmatprep.subr.bf16.mxu0 0
    %91 = vmatpush2.bf16.msra.mxu0 0
    %92 = vmatprep.subr.bf16.mxu0 0
    %93 = vmatpush2.bf16.msra.mxu0 0
    %94 = vmatprep.subr.bf16.mxu0 0
    %95 = vmatpush2.bf16.msra.mxu0 0
    %96 = vmatprep.mubr.bf16.mxu0 0
    %97 = vmatmul.mubr.bf16.gmra.mxu0 %v58
    %v98 = vpop.f32.mrf.mxu0
    %v99 = vadd.f32 0.0, %v98
    %v100 = vpop.f32.mrf.mxu0
    %v101 = vpop.f32.mrf.mxu0
    %v102 = vpop.f32.mrf.mxu0
    %103 = vdwg.mxu0
    %v106 = vunpack.c.l.b16 %v51
    %v107 = vunpack.c.l.b16 %v52
    %v108 = vpack.c.b16 %v107, %v106
    %vm110 = vcmask 130048
    %v112 = vsel %vm110, %v50, 0
    %114 = vmatprep.subr.bf16.mxu0 0
    %115 = vmatpush1.bf16.msra.mxu0 0
    %116 = vmatprep.subr.bf16.mxu0 0
    %117 = vmatpush1.bf16.msra.mxu0 0
    %118 = vmatprep.subr.bf16.mxu0 0
    %119 = vmatpush1.bf16.msra.mxu0 0
    %120 = vmatprep.subr.bf16.mxu0 0
    %121 = vmatpush1.bf16.msra.mxu0 0
    %122 = vmatprep.subr.bf16.mxu0 0
    %123 = vmatpush1.bf16.msra.mxu0 0
    %124 = vmatprep.subr.bf16.mxu0 0
    %125 = vmatpush1.bf16.msra.mxu0 0
    %126 = vmatprep.subr.bf16.mxu0 0
    %127 = vmatpush1.bf16.msra.mxu0 0
    %128 = vmatprep.subr.bf16.mxu0 0
    %129 = vmatpush1.bf16.msra.mxu0 %v108
    %130 = vmatprep.subr.bf16.mxu0 0
    %131 = vmatpush2.bf16.msra.mxu0 0
    %132 = vmatprep.subr.bf16.mxu0 0
    %133 = vmatpush2.bf16.msra.mxu0 0
    %134 = vmatprep.subr.bf16.mxu0 0
    %135 = vmatpush2.bf16.msra.mxu0 0
    %136 = vmatprep.subr.bf16.mxu0 0
    %137 = vmatpush2.bf16.msra.mxu0 0
    %138 = vmatprep.subr.bf16.mxu0 0
    %139 = vmatpush2.bf16.msra.mxu0 0
    %140 = vmatprep.subr.bf16.mxu0 0
    %141 = vmatpush2.bf16.msra.mxu0 0
    %142 = vmatprep.subr.bf16.mxu0 0
    %143 = vmatpush2.bf16.msra.mxu0 0
    %144 = vmatprep.subr.bf16.mxu0 0
    %145 = vmatpush2.bf16.msra.mxu0 0
    %146 = vmatprep.mubr.bf16.mxu0 0
    %147 = vmatmul.mubr.bf16.gmra.mxu0 %v112
    %v148 = vpop.f32.mrf.mxu0
    %v149 = vadd.f32 %v99, %v148
    %v150 = vpop.f32.mrf.mxu0
    %v151 = vpop.f32.mrf.mxu0
    %v152 = vpop.f32.mrf.mxu0
    %153 = vdwg.mxu0
    %v154 = vld [vmem:[%s2] sm:$0xff]
    %v155 = vpack.c.bf16 %v154, %v154
    %v156 = vld [vmem:[%s5] sm:$0xf]
    %v158 = vsel %vm56, %v155, 0
    %v161 = vsel %vm60, %v156, 0
    %163 = vmatprep.subr.bf16.mxu0 0
    %164 = vmatpush1.bf16.msra.mxu0 0
    %165 = vmatprep.subr.bf16.mxu0 0
    %166 = vmatpush1.bf16.msra.mxu0 0
    %167 = vmatprep.subr.bf16.mxu0 0
    %168 = vmatpush1.bf16.msra.mxu0 0
    %169 = vmatprep.subr.bf16.mxu0 0
    %170 = vmatpush1.bf16.msra.mxu0 0
    %171 = vmatprep.subr.bf16.mxu0 0
    %172 = vmatpush1.bf16.msra.mxu0 0
    %173 = vmatprep.subr.bf16.mxu0 0
    %174 = vmatpush1.bf16.msra.mxu0 0
    %175 = vmatprep.subr.bf16.mxu0 0
    %176 = vmatpush1.bf16.msra.mxu0 0
    %177 = vmatprep.subr.bf16.mxu0 0
    %178 = vmatpush1.bf16.msra.mxu0 %v161
    %179 = vmatprep.subr.bf16.mxu0 0
    %180 = vmatpush2.bf16.msra.mxu0 0
    %181 = vmatprep.subr.bf16.mxu0 0
    %182 = vmatpush2.bf16.msra.mxu0 0
    %183 = vmatprep.subr.bf16.mxu0 0
    %184 = vmatpush2.bf16.msra.mxu0 0
    %185 = vmatprep.subr.bf16.mxu0 0
    %186 = vmatpush2.bf16.msra.mxu0 0
    %187 = vmatprep.subr.bf16.mxu0 0
    %188 = vmatpush2.bf16.msra.mxu0 0
    %189 = vmatprep.subr.bf16.mxu0 0
    %190 = vmatpush2.bf16.msra.mxu0 0
    %191 = vmatprep.subr.bf16.mxu0 0
    %192 = vmatpush2.bf16.msra.mxu0 0
    %193 = vmatprep.subr.bf16.mxu0 0
    %194 = vmatpush2.bf16.msra.mxu0 0
    %195 = vmatprep.mubr.bf16.mxu0 0
    %196 = vmatmul.mubr.bf16.gmra.mxu0 %v158
    %v197 = vpop.f32.mrf.mxu0
    %v198 = vadd.f32 0.0, %v197
    %v199 = vpop.f32.mrf.mxu0
    %v200 = vpop.f32.mrf.mxu0
    %v201 = vpop.f32.mrf.mxu0
    %202 = vdwg.mxu0
    %v203 = vadd.f32 %v149, %v198
    %v204 = vld [vmem:[%s6] sm:$0x1]
    %v206 = vlaneseq
    %v207 = vshrl.u32 %v206, 7
    %v208 = vsub.s32 0, %v207
    %v209 = vrot.slane %v204, %v208
    %v211 = vadd.f32 %v203, %v209
    %v212 = vmax.f32 %v211, 0.0
    %v213 = vld [vmem:[%s7] sm:$0xf]
    %v214 = vld [vmem:[%s7 + $0x4] sm:$0xf]
    %v215 = vld [vmem:[%s7 + $0x8] sm:$0xf]
    %v216 = vld [vmem:[%s7 + $0xc] sm:$0xf]
    %v217 = vld [vmem:[%s8] sm:$0x1]
    %v218 = vpack.c.bf16 %v212, %v212
    %v220 = vlaneseq
    %v221 = vshrl.u32 %v220, 7
    %v222 = vsub.s32 0, %v221
    %v223 = vrot.slane %v217, %v222
    %v229 = vunpack.c.l.b16 %v213
    %v230 = vunpack.c.l.b16 %v214
    %v231 = vunpack.c.l.b16 %v215
    %v232 = vunpack.c.l.b16 %v216
    %v233 = vpack.c.b16 %v230, %v229
    %v234 = vpack.c.b16 %v232, %v231
    %vm237 = vcmask 261120
    %v239 = vsel %vm237, %v218, 0
    %241 = vmatprep.subr.bf16.mxu0 0
    %242 = vmatpush1.bf16.msra.mxu0 0
    %243 = vmatprep.subr.bf16.mxu0 0
    %244 = vmatpush1.bf16.msra.mxu0 0
    %245 = vmatprep.subr.bf16.mxu0 0
    %246 = vmatpush1.bf16.msra.mxu0 0
    %247 = vmatprep.subr.bf16.mxu0 0
    %248 = vmatpush1.bf16.msra.mxu0 0
    %249 = vmatprep.subr.bf16.mxu0 0
    %250 = vmatpush1.bf16.msra.mxu0 0
    %251 = vmatprep.subr.bf16.mxu0 0
    %252 = vmatpush1.bf16.msra.mxu0 0
    %253 = vmatprep.subr.bf16.mxu0 0
    %254 = vmatpush1.bf16.msra.mxu0 %v234
    %255 = vmatprep.subr.bf16.mxu0 0
    %256 = vmatpush1.bf16.msra.mxu0 %v233
    %257 = vmatprep.subr.bf16.mxu0 0
    %258 = vmatpush2.bf16.msra.mxu0 0
    %259 = vmatprep.subr.bf16.mxu0 0
    %260 = vmatpush2.bf16.msra.mxu0 0
    %261 = vmatprep.subr.bf16.mxu0 0
    %262 = vmatpush2.bf16.msra.mxu0 0
    %263 = vmatprep.subr.bf16.mxu0 0
    %264 = vmatpush2.bf16.msra.mxu0 0
    %265 = vmatprep.subr.bf16.mxu0 0
    %266 = vmatpush2.bf16.msra.mxu0 0
    %267 = vmatprep.subr.bf16.mxu0 0
    %268 = vmatpush2.bf16.msra.mxu0 0
    %269 = vmatprep.subr.bf16.mxu0 0
    %270 = vmatpush2.bf16.msra.mxu0 0
    %271 = vmatprep.subr.bf16.mxu0 0
    %272 = vmatpush2.bf16.msra.mxu0 0
    %273 = vmatprep.mubr.bf16.mxu0 0
    %274 = vmatmul.mubr.bf16.gmra.mxu0 %v239
    %v275 = vpop.f32.mrf.mxu0
    %v276 = vadd.f32 %v223, %v275
    %v277 = vpop.f32.mrf.mxu0
    %v278 = vpop.f32.mrf.mxu0
    %v279 = vpop.f32.mrf.mxu0
    %280 = vdwg.mxu0
    %v281 = vmax.f32 %v276, 0.0
    %v282 = vpack.c.bf16 %v281, %v281
    %v283 = vld [vmem:[%s9] sm:$0xf]
    %v284 = vld [vmem:[%s9 + $0x4] sm:$0xf]
    %v285 = vld [vmem:[%s9 + $0x8] sm:$0xf]
    %v286 = vld [vmem:[%s9 + $0xc] sm:$0xf]
    %v287 = vld [vmem:[%s9 + $0x10] sm:$0xf]
    %v288 = vld [vmem:[%s9 + $0x14] sm:$0xf]
    %v289 = vld [vmem:[%s9 + $0x18] sm:$0xf]
    %v290 = vld [vmem:[%s10] sm:$0x1]
    %v292 = vlaneseq
    %v293 = vshrl.u32 %v292, 7
    %v294 = vsub.s32 0, %v293
    %v295 = vrot.slane %v290, %v294
    %v304 = vunpack.c.l.b16 %v283
    %v305 = vunpack.c.l.b16 %v284
    %v306 = vunpack.c.l.b16 %v285
    %v307 = vunpack.c.l.b16 %v286
    %v308 = vunpack.c.l.b16 %v287
    %v309 = vunpack.c.l.b16 %v288
    %v310 = vunpack.c.l.b16 %v289
    %v311 = vpack.c.b16 %v305, %v304
    %v312 = vpack.c.b16 %v307, %v306
    %v313 = vpack.c.b16 %v309, %v308
    %v314 = vpack.c.b16 %v310, %v310
    %vm318 = vcmask 457728
    %v320 = vsel %vm318, %v282, 0
    %v323 = vsel %vm60, %v314, 0
    %325 = vmatprep.subr.bf16.mxu0 0
    %326 = vmatpush1.bf16.msra.mxu0 0
    %327 = vmatprep.subr.bf16.mxu0 0
    %328 = vmatpush1.bf16.msra.mxu0 0
    %329 = vmatprep.subr.bf16.mxu0 0
    %330 = vmatpush1.bf16.msra.mxu0 0
    %331 = vmatprep.subr.bf16.mxu0 0
    %332 = vmatpush1.bf16.msra.mxu0 0
    %333 = vmatprep.subr.bf16.mxu0 0
    %334 = vmatpush1.bf16.msra.mxu0 %v323
    %335 = vmatprep.subr.bf16.mxu0 0
    %336 = vmatpush1.bf16.msra.mxu0 %v313
    %337 = vmatprep.subr.bf16.mxu0 0
    %338 = vmatpush1.bf16.msra.mxu0 %v312
    %339 = vmatprep.subr.bf16.mxu0 0
    %340 = vmatpush1.bf16.msra.mxu0 %v311
    %341 = vmatprep.subr.bf16.mxu0 0
    %342 = vmatpush2.bf16.msra.mxu0 0
    %343 = vmatprep.subr.bf16.mxu0 0
    %344 = vmatpush2.bf16.msra.mxu0 0
    %345 = vmatprep.subr.bf16.mxu0 0
    %346 = vmatpush2.bf16.msra.mxu0 0
    %347 = vmatprep.subr.bf16.mxu0 0
    %348 = vmatpush2.bf16.msra.mxu0 0
    %349 = vmatprep.subr.bf16.mxu0 0
    %350 = vmatpush2.bf16.msra.mxu0 0
    %351 = vmatprep.subr.bf16.mxu0 0
    %352 = vmatpush2.bf16.msra.mxu0 0
    %353 = vmatprep.subr.bf16.mxu0 0
    %354 = vmatpush2.bf16.msra.mxu0 0
    %355 = vmatprep.subr.bf16.mxu0 0
    %356 = vmatpush2.bf16.msra.mxu0 0
    %357 = vmatprep.mubr.bf16.mxu0 0
    %358 = vmatmul.mubr.bf16.gmra.mxu0 %v320
    %v359 = vpop.f32.mrf.mxu0
    %v360 = vadd.f32 %v295, %v359
    %v361 = vpop.f32.mrf.mxu0
    %v362 = vpop.f32.mrf.mxu0
    %v363 = vpop.f32.mrf.mxu0
    %364 = vdwg.mxu0
    %365 = vst.msk [vmem:[#allocation2] sm:$0xff] %vm110, %v360
    %v366 = vld [vmem:[%s11] sm:$0xf]
    %v367 = vld [vmem:[%s11 + $0x4] sm:$0xf]
    %v368 = vld [vmem:[%s11 + $0x8] sm:$0xf]
    %v369 = vld [vmem:[%s11 + $0xc] sm:$0xf]
    %v370 = vld [vmem:[%s11 + $0x10] sm:$0xf]
    %v371 = vld [vmem:[%s11 + $0x14] sm:$0xf]
    %v372 = vld [vmem:[%s11 + $0x18] sm:$0xf]
    %v373 = vld [vmem:[%s12] sm:$0x1]
    %v375 = vlaneseq
    %v376 = vshrl.u32 %v375, 7
    %v377 = vsub.s32 0, %v376
    %v378 = vrot.slane %v373, %v377
    %v387 = vunpack.c.l.b16 %v366
    %v388 = vunpack.c.l.b16 %v367
    %v389 = vunpack.c.l.b16 %v368
    %v390 = vunpack.c.l.b16 %v369
    %v391 = vunpack.c.l.b16 %v370
    %v392 = vunpack.c.l.b16 %v371
    %v393 = vunpack.c.l.b16 %v372
    %v394 = vpack.c.b16 %v388, %v387
    %v395 = vpack.c.b16 %v390, %v389
    %v396 = vpack.c.b16 %v392, %v391
    %v397 = vpack.c.b16 %v393, %v393
    %v402 = vsel %vm60, %v397, 0
    %404 = vmatprep.subr.bf16.mxu0 0
    %405 = vmatpush1.bf16.msra.mxu0 0
    %406 = vmatprep.subr.bf16.mxu0 0
    %407 = vmatpush1.bf16.msra.mxu0 0
    %408 = vmatprep.subr.bf16.mxu0 0
    %409 = vmatpush1.bf16.msra.mxu0 0
    %410 = vmatprep.subr.bf16.mxu0 0
    %411 = vmatpush1.bf16.msra.mxu0 0
    %412 = vmatprep.subr.bf16.mxu0 0
    %413 = vmatpush1.bf16.msra.mxu0 %v402
    %414 = vmatprep.subr.bf16.mxu0 0
    %415 = vmatpush1.bf16.msra.mxu0 %v396
    %416 = vmatprep.subr.bf16.mxu0 0
    %417 = vmatpush1.bf16.msra.mxu0 %v395
    %418 = vmatprep.subr.bf16.mxu0 0
    %419 = vmatpush1.bf16.msra.mxu0 %v394
    %420 = vmatprep.subr.bf16.mxu0 0
    %421 = vmatpush2.bf16.msra.mxu0 0
    %422 = vmatprep.subr.bf16.mxu0 0
    %423 = vmatpush2.bf16.msra.mxu0 0
    %424 = vmatprep.subr.bf16.mxu0 0
    %425 = vmatpush2.bf16.msra.mxu0 0
    %426 = vmatprep.subr.bf16.mxu0 0
    %427 = vmatpush2.bf16.msra.mxu0 0
    %428 = vmatprep.subr.bf16.mxu0 0
    %429 = vmatpush2.bf16.msra.mxu0 0
    %430 = vmatprep.subr.bf16.mxu0 0
    %431 = vmatpush2.bf16.msra.mxu0 0
    %432 = vmatprep.subr.bf16.mxu0 0
    %433 = vmatpush2.bf16.msra.mxu0 0
    %434 = vmatprep.subr.bf16.mxu0 0
    %435 = vmatpush2.bf16.msra.mxu0 0
    %436 = vmatprep.mubr.bf16.mxu0 0
    %437 = vmatmul.mubr.bf16.gmra.mxu0 %v320
    %v438 = vpop.f32.mrf.mxu0
    %v439 = vadd.f32 %v378, %v438
    %v440 = vpop.f32.mrf.mxu0
    %v441 = vpop.f32.mrf.mxu0
    %v442 = vpop.f32.mrf.mxu0
    %443 = vdwg.mxu0
    %444 = vst.msk [vmem:[#allocation4] sm:$0xff] %vm56, %v439
    %s445 = scalar_lea.vmem %s11, 28
    %v446 = vld [vmem:[%s445] sm:$0xf]
    %v447 = vld [vmem:[%s445 + $0x4] sm:$0xf]
    %v448 = vld [vmem:[%s445 + $0x8] sm:$0xf]
    %v449 = vld [vmem:[%s445 + $0xc] sm:$0xf]
    %v450 = vld [vmem:[%s445 + $0x10] sm:$0xf]
    %v451 = vld [vmem:[%s445 + $0x14] sm:$0xf]
    %v452 = vld [vmem:[%s445 + $0x18] sm:$0xf]
    %s453 = scalar_lea.vmem %s12, 1
    %v454 = vld [vmem:[%s453] sm:$0x1]
    %v456 = vlaneseq
    %v457 = vshrl.u32 %v456, 7
    %v458 = vsub.s32 0, %v457
    %v459 = vrot.slane %v454, %v458
    %v468 = vunpack.c.l.b16 %v446
    %v469 = vunpack.c.l.b16 %v447
    %v470 = vunpack.c.l.b16 %v448
    %v471 = vunpack.c.l.b16 %v449
    %v472 = vunpack.c.l.b16 %v450
    %v473 = vunpack.c.l.b16 %v451
    %v474 = vunpack.c.l.b16 %v452
    %v475 = vpack.c.b16 %v469, %v468
    %v476 = vpack.c.b16 %v471, %v470
    %v477 = vpack.c.b16 %v473, %v472
    %v478 = vpack.c.b16 %v474, %v474
    %v483 = vsel %vm60, %v478, 0
    %485 = vmatprep.subr.bf16.mxu0 0
    %486 = vmatpush1.bf16.msra.mxu0 0
    %487 = vmatprep.subr.bf16.mxu0 0
    %488 = vmatpush1.bf16.msra.mxu0 0
    %489 = vmatprep.subr.bf16.mxu0 0
    %490 = vmatpush1.bf16.msra.mxu0 0
    %491 = vmatprep.subr.bf16.mxu0 0
    %492 = vmatpush1.bf16.msra.mxu0 0
    %493 = vmatprep.subr.bf16.mxu0 0
    %494 = vmatpush1.bf16.msra.mxu0 %v483
    %495 = vmatprep.subr.bf16.mxu0 0
    %496 = vmatpush1.bf16.msra.mxu0 %v477
    %497 = vmatprep.subr.bf16.mxu0 0
    %498 = vmatpush1.bf16.msra.mxu0 %v476
    %499 = vmatprep.subr.bf16.mxu0 0
    %500 = vmatpush1.bf16.msra.mxu0 %v475
    %501 = vmatprep.subr.bf16.mxu0 0
    %502 = vmatpush2.bf16.msra.mxu0 0
    %503 = vmatprep.subr.bf16.mxu0 0
    %504 = vmatpush2.bf16.msra.mxu0 0
    %505 = vmatprep.subr.bf16.mxu0 0
    %506 = vmatpush2.bf16.msra.mxu0 0
    %507 = vmatprep.subr.bf16.mxu0 0
    %508 = vmatpush2.bf16.msra.mxu0 0
    %509 = vmatprep.subr.bf16.mxu0 0
    %510 = vmatpush2.bf16.msra.mxu0 0
    %511 = vmatprep.subr.bf16.mxu0 0
    %512 = vmatpush2.bf16.msra.mxu0 0
    %513 = vmatprep.subr.bf16.mxu0 0
    %514 = vmatpush2.bf16.msra.mxu0 0
    %515 = vmatprep.subr.bf16.mxu0 0
    %516 = vmatpush2.bf16.msra.mxu0 0
    %517 = vmatprep.mubr.bf16.mxu0 0
    %518 = vmatmul.mubr.bf16.gmra.mxu0 %v320
    %v519 = vpop.f32.mrf.mxu0
    %v520 = vadd.f32 %v459, %v519
    %v521 = vpop.f32.mrf.mxu0
    %v522 = vpop.f32.mrf.mxu0
    %v523 = vpop.f32.mrf.mxu0
    %524 = vdwg.mxu0
    %s525 = scalar_lea.vmem [#allocation4], 8
    %526 = vst.msk [vmem:[%s525] sm:$0xff] %vm56, %v520
    %s527 = scalar_lea.vmem %s11, 56
    %v528 = vld [vmem:[%s527] sm:$0xf]
    %v529 = vld [vmem:[%s527 + $0x4] sm:$0xf]
    %v530 = vld [vmem:[%s527 + $0x8] sm:$0xf]
    %v531 = vld [vmem:[%s527 + $0xc] sm:$0xf]
    %v532 = vld [vmem:[%s527 + $0x10] sm:$0xf]
    %v533 = vld [vmem:[%s527 + $0x14] sm:$0xf]
    %v534 = vld [vmem:[%s527 + $0x18] sm:$0xf]
    %s535 = scalar_lea.vmem %s12, 2
    %v536 = vld [vmem:[%s535] sm:$0x1]
    %v538 = vlaneseq
    %v539 = vshrl.u32 %v538, 7
    %v540 = vsub.s32 0, %v539
    %v541 = vrot.slane %v536, %v540
    %v550 = vunpack.c.l.b16 %v528
    %v551 = vunpack.c.l.b16 %v529
    %v552 = vunpack.c.l.b16 %v530
    %v553 = vunpack.c.l.b16 %v531
    %v554 = vunpack.c.l.b16 %v532
    %v555 = vunpack.c.l.b16 %v533
    %v556 = vunpack.c.l.b16 %v534
    %v557 = vpack.c.b16 %v551, %v550
    %v558 = vpack.c.b16 %v553, %v552
    %v559 = vpack.c.b16 %v555, %v554
    %v560 = vpack.c.b16 %v556, %v556
    %v565 = vsel %vm60, %v560, 0
    %567 = vmatprep.subr.bf16.mxu0 0
    %568 = vmatpush1.bf16.msra.mxu0 0
    %569 = vmatprep.subr.bf16.mxu0 0
    %570 = vmatpush1.bf16.msra.mxu0 0
    %571 = vmatprep.subr.bf16.mxu0 0
    %572 = vmatpush1.bf16.msra.mxu0 0
    %573 = vmatprep.subr.bf16.mxu0 0
    %574 = vmatpush1.bf16.msra.mxu0 0
    %575 = vmatprep.subr.bf16.mxu0 0
    %576 = vmatpush1.bf16.msra.mxu0 %v565
    %577 = vmatprep.subr.bf16.mxu0 0
    %578 = vmatpush1.bf16.msra.mxu0 %v559
    %579 = vmatprep.subr.bf16.mxu0 0
    %580 = vmatpush1.bf16.msra.mxu0 %v558
    %581 = vmatprep.subr.bf16.mxu0 0
    %582 = vmatpush1.bf16.msra.mxu0 %v557
    %583 = vmatprep.subr.bf16.mxu0 0
    %584 = vmatpush2.bf16.msra.mxu0 0
    %585 = vmatprep.subr.bf16.mxu0 0
    %586 = vmatpush2.bf16.msra.mxu0 0
    %587 = vmatprep.subr.bf16.mxu0 0
    %588 = vmatpush2.bf16.msra.mxu0 0
    %589 = vmatprep.subr.bf16.mxu0 0
    %590 = vmatpush2.bf16.msra.mxu0 0
    %591 = vmatprep.subr.bf16.mxu0 0
    %592 = vmatpush2.bf16.msra.mxu0 0
    %593 = vmatprep.subr.bf16.mxu0 0
    %594 = vmatpush2.bf16.msra.mxu0 0
    %595 = vmatprep.subr.bf16.mxu0 0
    %596 = vmatpush2.bf16.msra.mxu0 0
    %597 = vmatprep.subr.bf16.mxu0 0
    %598 = vmatpush2.bf16.msra.mxu0 0
    %599 = vmatprep.mubr.bf16.mxu0 0
    %600 = vmatmul.mubr.bf16.gmra.mxu0 %v320
    %v601 = vpop.f32.mrf.mxu0
    %v602 = vadd.f32 %v541, %v601
    %v603 = vpop.f32.mrf.mxu0
    %v604 = vpop.f32.mrf.mxu0
    %v605 = vpop.f32.mrf.mxu0
    %606 = vdwg.mxu0
    %s607 = scalar_lea.vmem [#allocation4], 16
    %608 = vst.msk [vmem:[%s607] sm:$0xff] %vm56, %v602
    %s609 = scalar_lea.vmem %s11, 84
    %v610 = vld [vmem:[%s609] sm:$0xf]
    %v611 = vld [vmem:[%s609 + $0x4] sm:$0xf]
    %v612 = vld [vmem:[%s609 + $0x8] sm:$0xf]
    %v613 = vld [vmem:[%s609 + $0xc] sm:$0xf]
    %v614 = vld [vmem:[%s609 + $0x10] sm:$0xf]
    %v615 = vld [vmem:[%s609 + $0x14] sm:$0xf]
    %v616 = vld [vmem:[%s609 + $0x18] sm:$0xf]
    %s617 = scalar_lea.vmem %s12, 3
    %v618 = vld [vmem:[%s617] sm:$0x1]
    %v620 = vlaneseq
    %v621 = vshrl.u32 %v620, 7
    %v622 = vsub.s32 0, %v621
    %v623 = vrot.slane %v618, %v622
    %v632 = vunpack.c.l.b16 %v610
    %v633 = vunpack.c.l.b16 %v611
    %v634 = vunpack.c.l.b16 %v612
    %v635 = vunpack.c.l.b16 %v613
    %v636 = vunpack.c.l.b16 %v614
    %v637 = vunpack.c.l.b16 %v615
    %v638 = vunpack.c.l.b16 %v616
    %v639 = vpack.c.b16 %v633, %v632
    %v640 = vpack.c.b16 %v635, %v634
    %v641 = vpack.c.b16 %v637, %v636
    %v642 = vpack.c.b16 %v638, %v638
    %v647 = vsel %vm60, %v642, 0
    %649 = vmatprep.subr.bf16.mxu0 0
    %650 = vmatpush1.bf16.msra.mxu0 0
    %651 = vmatprep.subr.bf16.mxu0 0
    %652 = vmatpush1.bf16.msra.mxu0 0
    %653 = vmatprep.subr.bf16.mxu0 0
    %654 = vmatpush1.bf16.msra.mxu0 0
    %655 = vmatprep.subr.bf16.mxu0 0
    %656 = vmatpush1.bf16.msra.mxu0 0
    %657 = vmatprep.subr.bf16.mxu0 0
    %658 = vmatpush1.bf16.msra.mxu0 %v647
    %659 = vmatprep.subr.bf16.mxu0 0
    %660 = vmatpush1.bf16.msra.mxu0 %v641
    %661 = vmatprep.subr.bf16.mxu0 0
    %662 = vmatpush1.bf16.msra.mxu0 %v640
    %663 = vmatprep.subr.bf16.mxu0 0
    %664 = vmatpush1.bf16.msra.mxu0 %v639
    %665 = vmatprep.subr.bf16.mxu0 0
    %666 = vmatpush2.bf16.msra.mxu0 0
    %667 = vmatprep.subr.bf16.mxu0 0
    %668 = vmatpush2.bf16.msra.mxu0 0
    %669 = vmatprep.subr.bf16.mxu0 0
    %670 = vmatpush2.bf16.msra.mxu0 0
    %671 = vmatprep.subr.bf16.mxu0 0
    %672 = vmatpush2.bf16.msra.mxu0 0
    %673 = vmatprep.subr.bf16.mxu0 0
    %674 = vmatpush2.bf16.msra.mxu0 0
    %675 = vmatprep.subr.bf16.mxu0 0
    %676 = vmatpush2.bf16.msra.mxu0 0
    %677 = vmatprep.subr.bf16.mxu0 0
    %678 = vmatpush2.bf16.msra.mxu0 0
    %679 = vmatprep.subr.bf16.mxu0 0
    %680 = vmatpush2.bf16.msra.mxu0 0
    %681 = vmatprep.mubr.bf16.mxu0 0
    %682 = vmatmul.mubr.bf16.gmra.mxu0 %v320
    %v683 = vpop.f32.mrf.mxu0
    %v684 = vadd.f32 %v623, %v683
    %v685 = vpop.f32.mrf.mxu0
    %v686 = vpop.f32.mrf.mxu0
    %v687 = vpop.f32.mrf.mxu0
    %688 = vdwg.mxu0
    %s689 = scalar_lea.vmem [#allocation4], 24
    %690 = vst.msk [vmem:[%s689] sm:$0xff] %vm56, %v684
    %s691 = scalar_lea.vmem %s11, 112
    %v692 = vld [vmem:[%s691] sm:$0xf]
    %v693 = vld [vmem:[%s691 + $0x4] sm:$0xf]
    %v694 = vld [vmem:[%s691 + $0x8] sm:$0xf]
    %v695 = vld [vmem:[%s691 + $0xc] sm:$0xf]
    %v696 = vld [vmem:[%s691 + $0x10] sm:$0xf]
    %v697 = vld [vmem:[%s691 + $0x14] sm:$0xf]
    %v698 = vld [vmem:[%s691 + $0x18] sm:$0xf]
    %s699 = scalar_lea.vmem %s12, 4
    %v700 = vld [vmem:[%s699] sm:$0x1]
    %v702 = vlaneseq
    %v703 = vshrl.u32 %v702, 7
    %v704 = vsub.s32 0, %v703
    %v705 = vrot.slane %v700, %v704
    %v714 = vunpack.c.l.b16 %v692
    %v715 = vunpack.c.l.b16 %v693
    %v716 = vunpack.c.l.b16 %v694
    %v717 = vunpack.c.l.b16 %v695
    %v718 = vunpack.c.l.b16 %v696
    %v719 = vunpack.c.l.b16 %v697
    %v720 = vunpack.c.l.b16 %v698
    %v721 = vpack.c.b16 %v715, %v714
    %v722 = vpack.c.b16 %v717, %v716
    %v723 = vpack.c.b16 %v719, %v718
    %v724 = vpack.c.b16 %v720, %v720
    %v729 = vsel %vm60, %v724, 0
    %731 = vmatprep.subr.bf16.mxu0 0
    %732 = vmatpush1.bf16.msra.mxu0 0
    %733 = vmatprep.subr.bf16.mxu0 0
    %734 = vmatpush1.bf16.msra.mxu0 0
    %735 = vmatprep.subr.bf16.mxu0 0
    %736 = vmatpush1.bf16.msra.mxu0 0
    %737 = vmatprep.subr.bf16.mxu0 0
    %738 = vmatpush1.bf16.msra.mxu0 0
    %739 = vmatprep.subr.bf16.mxu0 0
    %740 = vmatpush1.bf16.msra.mxu0 %v729
    %741 = vmatprep.subr.bf16.mxu0 0
    %742 = vmatpush1.bf16.msra.mxu0 %v723
    %743 = vmatprep.subr.bf16.mxu0 0
    %744 = vmatpush1.bf16.msra.mxu0 %v722
    %745 = vmatprep.subr.bf16.mxu0 0
    %746 = vmatpush1.bf16.msra.mxu0 %v721
    %747 = vmatprep.subr.bf16.mxu0 0
    %748 = vmatpush2.bf16.msra.mxu0 0
    %749 = vmatprep.subr.bf16.mxu0 0
    %750 = vmatpush2.bf16.msra.mxu0 0
    %751 = vmatprep.subr.bf16.mxu0 0
    %752 = vmatpush2.bf16.msra.mxu0 0
    %753 = vmatprep.subr.bf16.mxu0 0
    %754 = vmatpush2.bf16.msra.mxu0 0
    %755 = vmatprep.subr.bf16.mxu0 0
    %756 = vmatpush2.bf16.msra.mxu0 0
    %757 = vmatprep.subr.bf16.mxu0 0
    %758 = vmatpush2.bf16.msra.mxu0 0
    %759 = vmatprep.subr.bf16.mxu0 0
    %760 = vmatpush2.bf16.msra.mxu0 0
    %761 = vmatprep.subr.bf16.mxu0 0
    %762 = vmatpush2.bf16.msra.mxu0 0
    %763 = vmatprep.mubr.bf16.mxu0 0
    %764 = vmatmul.mubr.bf16.gmra.mxu0 %v320
    %v765 = vpop.f32.mrf.mxu0
    %v766 = vadd.f32 %v705, %v765
    %v767 = vpop.f32.mrf.mxu0
    %v768 = vpop.f32.mrf.mxu0
    %v769 = vpop.f32.mrf.mxu0
    %770 = vdwg.mxu0
    %s771 = scalar_lea.vmem [#allocation4], 32
    %772 = vst.msk [vmem:[%s771] sm:$0xff] %vm56, %v766
    %s773 = scalar_lea.vmem %s11, 140
    %v774 = vld [vmem:[%s773] sm:$0xf]
    %v775 = vld [vmem:[%s773 + $0x4] sm:$0xf]
    %v776 = vld [vmem:[%s773 + $0x8] sm:$0xf]
    %v777 = vld [vmem:[%s773 + $0xc] sm:$0xf]
    %v778 = vld [vmem:[%s773 + $0x10] sm:$0xf]
    %v779 = vld [vmem:[%s773 + $0x14] sm:$0xf]
    %v780 = vld [vmem:[%s773 + $0x18] sm:$0xf]
    %s781 = scalar_lea.vmem %s12, 5
    %v782 = vld [vmem:[%s781] sm:$0x1]
    %v784 = vlaneseq
    %v785 = vshrl.u32 %v784, 7
    %v786 = vsub.s32 0, %v785
    %v787 = vrot.slane %v782, %v786
    %v796 = vunpack.c.l.b16 %v774
    %v797 = vunpack.c.l.b16 %v775
    %v798 = vunpack.c.l.b16 %v776
    %v799 = vunpack.c.l.b16 %v777
    %v800 = vunpack.c.l.b16 %v778
    %v801 = vunpack.c.l.b16 %v779
    %v802 = vunpack.c.l.b16 %v780
    %v803 = vpack.c.b16 %v797, %v796
    %v804 = vpack.c.b16 %v799, %v798
    %v805 = vpack.c.b16 %v801, %v800
    %v806 = vpack.c.b16 %v802, %v802
    %v811 = vsel %vm60, %v806, 0
    %813 = vmatprep.subr.bf16.mxu0 0
    %814 = vmatpush1.bf16.msra.mxu0 0
    %815 = vmatprep.subr.bf16.mxu0 0
    %816 = vmatpush1.bf16.msra.mxu0 0
    %817 = vmatprep.subr.bf16.mxu0 0
    %818 = vmatpush1.bf16.msra.mxu0 0
    %819 = vmatprep.subr.bf16.mxu0 0
    %820 = vmatpush1.bf16.msra.mxu0 0
    %821 = vmatprep.subr.bf16.mxu0 0
    %822 = vmatpush1.bf16.msra.mxu0 %v811
    %823 = vmatprep.subr.bf16.mxu0 0
    %824 = vmatpush1.bf16.msra.mxu0 %v805
    %825 = vmatprep.subr.bf16.mxu0 0
    %826 = vmatpush1.bf16.msra.mxu0 %v804
    %827 = vmatprep.subr.bf16.mxu0 0
    %828 = vmatpush1.bf16.msra.mxu0 %v803
    %829 = vmatprep.subr.bf16.mxu0 0
    %830 = vmatpush2.bf16.msra.mxu0 0
    %831 = vmatprep.subr.bf16.mxu0 0
    %832 = vmatpush2.bf16.msra.mxu0 0
    %833 = vmatprep.subr.bf16.mxu0 0
    %834 = vmatpush2.bf16.msra.mxu0 0
    %835 = vmatprep.subr.bf16.mxu0 0
    %836 = vmatpush2.bf16.msra.mxu0 0
    %837 = vmatprep.subr.bf16.mxu0 0
    %838 = vmatpush2.bf16.msra.mxu0 0
    %839 = vmatprep.subr.bf16.mxu0 0
    %840 = vmatpush2.bf16.msra.mxu0 0
    %841 = vmatprep.subr.bf16.mxu0 0
    %842 = vmatpush2.bf16.msra.mxu0 0
    %843 = vmatprep.subr.bf16.mxu0 0
    %844 = vmatpush2.bf16.msra.mxu0 0
    %845 = vmatprep.mubr.bf16.mxu0 0
    %846 = vmatmul.mubr.bf16.gmra.mxu0 %v320
    %v847 = vpop.f32.mrf.mxu0
    %v848 = vadd.f32 %v787, %v847
    %v849 = vpop.f32.mrf.mxu0
    %v850 = vpop.f32.mrf.mxu0
    %v851 = vpop.f32.mrf.mxu0
    %852 = vdwg.mxu0
    %s853 = scalar_lea.vmem [#allocation4], 40
    %854 = vst.msk [vmem:[%s853] sm:$0xff] %vm56, %v848
    %s855 = scalar_lea.vmem %s11, 168
    %v856 = vld [vmem:[%s855] sm:$0xf]
    %v857 = vld [vmem:[%s855 + $0x4] sm:$0xf]
    %v858 = vld [vmem:[%s855 + $0x8] sm:$0xf]
    %v859 = vld [vmem:[%s855 + $0xc] sm:$0xf]
    %v860 = vld [vmem:[%s855 + $0x10] sm:$0xf]
    %v861 = vld [vmem:[%s855 + $0x14] sm:$0xf]
    %v862 = vld [vmem:[%s855 + $0x18] sm:$0xf]
    %s863 = scalar_lea.vmem %s12, 6
    %v864 = vld [vmem:[%s863] sm:$0x1]
    %v866 = vlaneseq
    %v867 = vshrl.u32 %v866, 7
    %v868 = vsub.s32 0, %v867
    %v869 = vrot.slane %v864, %v868
    %v878 = vunpack.c.l.b16 %v856
    %v879 = vunpack.c.l.b16 %v857
    %v880 = vunpack.c.l.b16 %v858
    %v881 = vunpack.c.l.b16 %v859
    %v882 = vunpack.c.l.b16 %v860
    %v883 = vunpack.c.l.b16 %v861
    %v884 = vunpack.c.l.b16 %v862
    %v885 = vpack.c.b16 %v879, %v878
    %v886 = vpack.c.b16 %v881, %v880
    %v887 = vpack.c.b16 %v883, %v882
    %v888 = vpack.c.b16 %v884, %v884
    %v893 = vsel %vm60, %v888, 0
    %895 = vmatprep.subr.bf16.mxu0 0
    %896 = vmatpush1.bf16.msra.mxu0 0
    %897 = vmatprep.subr.bf16.mxu0 0
    %898 = vmatpush1.bf16.msra.mxu0 0
    %899 = vmatprep.subr.bf16.mxu0 0
    %900 = vmatpush1.bf16.msra.mxu0 0
    %901 = vmatprep.subr.bf16.mxu0 0
    %902 = vmatpush1.bf16.msra.mxu0 0
    %903 = vmatprep.subr.bf16.mxu0 0
    %904 = vmatpush1.bf16.msra.mxu0 %v893
    %905 = vmatprep.subr.bf16.mxu0 0
    %906 = vmatpush1.bf16.msra.mxu0 %v887
    %907 = vmatprep.subr.bf16.mxu0 0
    %908 = vmatpush1.bf16.msra.mxu0 %v886
    %909 = vmatprep.subr.bf16.mxu0 0
    %910 = vmatpush1.bf16.msra.mxu0 %v885
    %911 = vmatprep.subr.bf16.mxu0 0
    %912 = vmatpush2.bf16.msra.mxu0 0
    %913 = vmatprep.subr.bf16.mxu0 0
    %914 = vmatpush2.bf16.msra.mxu0 0
    %915 = vmatprep.subr.bf16.mxu0 0
    %916 = vmatpush2.bf16.msra.mxu0 0
    %917 = vmatprep.subr.bf16.mxu0 0
    %918 = vmatpush2.bf16.msra.mxu0 0
    %919 = vmatprep.subr.bf16.mxu0 0
    %920 = vmatpush2.bf16.msra.mxu0 0
    %921 = vmatprep.subr.bf16.mxu0 0
    %922 = vmatpush2.bf16.msra.mxu0 0
    %923 = vmatprep.subr.bf16.mxu0 0
    %924 = vmatpush2.bf16.msra.mxu0 0
    %925 = vmatprep.subr.bf16.mxu0 0
    %926 = vmatpush2.bf16.msra.mxu0 0
    %927 = vmatprep.mubr.bf16.mxu0 0
    %928 = vmatmul.mubr.bf16.gmra.mxu0 %v320
    %v929 = vpop.f32.mrf.mxu0
    %v930 = vadd.f32 %v869, %v929
    %v931 = vpop.f32.mrf.mxu0
    %v932 = vpop.f32.mrf.mxu0
    %v933 = vpop.f32.mrf.mxu0
    %934 = vdwg.mxu0
    %s935 = scalar_lea.vmem [#allocation4], 48
    %936 = vst.msk [vmem:[%s935] sm:$0xff] %vm56, %v930
    %s937 = scalar_lea.vmem %s11, 196
    %v938 = vld [vmem:[%s937] sm:$0xf]
    %v939 = vld [vmem:[%s937 + $0x4] sm:$0xf]
    %v940 = vld [vmem:[%s937 + $0x8] sm:$0xf]
    %v941 = vld [vmem:[%s937 + $0xc] sm:$0xf]
    %v942 = vld [vmem:[%s937 + $0x10] sm:$0xf]
    %v943 = vld [vmem:[%s937 + $0x14] sm:$0xf]
    %v944 = vld [vmem:[%s937 + $0x18] sm:$0xf]
    %s945 = scalar_lea.vmem %s12, 7
    %v946 = vld [vmem:[%s945] sm:$0x1]
    %v948 = vlaneseq
    %v949 = vshrl.u32 %v948, 7
    %v950 = vsub.s32 0, %v949
    %v951 = vrot.slane %v946, %v950
    %v960 = vunpack.c.l.b16 %v938
    %v961 = vunpack.c.l.b16 %v939
    %v962 = vunpack.c.l.b16 %v940
    %v963 = vunpack.c.l.b16 %v941
    %v964 = vunpack.c.l.b16 %v942
    %v965 = vunpack.c.l.b16 %v943
    %v966 = vunpack.c.l.b16 %v944
    %v967 = vpack.c.b16 %v961, %v960
    %v968 = vpack.c.b16 %v963, %v962
    %v969 = vpack.c.b16 %v965, %v964
    %v970 = vpack.c.b16 %v966, %v966
    %v975 = vsel %vm60, %v970, 0
    %977 = vmatprep.subr.bf16.mxu0 0
    %978 = vmatpush1.bf16.msra.mxu0 0
    %979 = vmatprep.subr.bf16.mxu0 0
    %980 = vmatpush1.bf16.msra.mxu0 0
    %981 = vmatprep.subr.bf16.mxu0 0
    %982 = vmatpush1.bf16.msra.mxu0 0
    %983 = vmatprep.subr.bf16.mxu0 0
    %984 = vmatpush1.bf16.msra.mxu0 0
    %985 = vmatprep.subr.bf16.mxu0 0
    %986 = vmatpush1.bf16.msra.mxu0 %v975
    %987 = vmatprep.subr.bf16.mxu0 0
    %988 = vmatpush1.bf16.msra.mxu0 %v969
    %989 = vmatprep.subr.bf16.mxu0 0
    %990 = vmatpush1.bf16.msra.mxu0 %v968
    %991 = vmatprep.subr.bf16.mxu0 0
    %992 = vmatpush1.bf16.msra.mxu0 %v967
    %993 = vmatprep.subr.bf16.mxu0 0
    %994 = vmatpush2.bf16.msra.mxu0 0
    %995 = vmatprep.subr.bf16.mxu0 0
    %996 = vmatpush2.bf16.msra.mxu0 0
    %997 = vmatprep.subr.bf16.mxu0 0
    %998 = vmatpush2.bf16.msra.mxu0 0
    %999 = vmatprep.subr.bf16.mxu0 0
    %1000 = vmatpush2.bf16.msra.mxu0 0
    %1001 = vmatprep.subr.bf16.mxu0 0
    %1002 = vmatpush2.bf16.msra.mxu0 0
    %1003 = vmatprep.subr.bf16.mxu0 0
    %1004 = vmatpush2.bf16.msra.mxu0 0
    %1005 = vmatprep.subr.bf16.mxu0 0
    %1006 = vmatpush2.bf16.msra.mxu0 0
    %1007 = vmatprep.subr.bf16.mxu0 0
    %1008 = vmatpush2.bf16.msra.mxu0 0
    %1009 = vmatprep.mubr.bf16.mxu0 0
    %1010 = vmatmul.mubr.bf16.gmra.mxu0 %v320
    %v1011 = vpop.f32.mrf.mxu0
    %v1012 = vadd.f32 %v951, %v1011
    %v1013 = vpop.f32.mrf.mxu0
    %v1014 = vpop.f32.mrf.mxu0
    %v1015 = vpop.f32.mrf.mxu0
    %1016 = vdwg.mxu0
    %s1017 = scalar_lea.vmem [#allocation4], 56
    %1018 = vst.msk [vmem:[%s1017] sm:$0xff] %vm56, %v1012
    // Predicated region
    $region54: #{tpu_custom_call.1} parent=1 // pred_check
      _
    $region55: #{tpu_custom_call.1} parent=1 // pred_check_branch
      %1020 = sbr.rel (0) target = $region57
    $region56: #{tpu_custom_call.1} parent=1 // pred_region
      %s1022 = ssub.s32 128, 128
      %1023 = vsyncadd [#allocation3], %s1022
      %s1025 = sshll.u32 [#allocation2], 4
      %s1026 = int_to_ptr.vmem [resolvable:$true] %s1025
      %1028 = dma.vmem_to_hbm [thread:$0]  %s1026, 128, %s13, [#allocation3]
    $region57: #{tpu_custom_call.1} parent=1 // pred_fallthru
      _
    // Predicated region
    $region58: #{tpu_custom_call.1} parent=1 // pred_check
      _
    $region59: #{tpu_custom_call.1} parent=1 // pred_check_branch
      %1030 = sbr.rel (0) target = $region61
    $region60: #{tpu_custom_call.1} parent=1 // pred_region
      %s1032 = ssub.s32 1024, 1024
      %1033 = vsyncadd [#allocation5], %s1032
      %s1034 = sshll.u32 [#allocation4], 4
      %s1035 = int_to_ptr.vmem [resolvable:$true] %s1034
      %1040 = dma.vmem_to_hbm [thread:$0]  %s1035, 1024, %s14, [#allocation5], 128, 128, 8
    $region61: #{tpu_custom_call.1} parent=1 // pred_fallthru
      _
    // Predicated region
    $region62: #{tpu_custom_call.1} parent=1 // pred_check
      _
    $region63: #{tpu_custom_call.1} parent=1 // pred_check_branch
      %1042 = sbr.rel (0) target = $region65
    $region64: #{tpu_custom_call.1} parent=1 // pred_region
      %1043 = dma.done [#allocation3], 128
    $region65: #{tpu_custom_call.1} parent=1 // pred_fallthru
      _
    // Predicated region
    $region66: #{tpu_custom_call.1} parent=1 // pred_check
      _
    $region67: #{tpu_custom_call.1} parent=1 // pred_check_branch
      %1045 = sbr.rel (0) target = $region69
    $region68: #{tpu_custom_call.1} parent=1 // pred_region
      %1046 = dma.done [#allocation5], 1024
    $region69: #{tpu_custom_call.1} parent=1 // pred_fallthru
      _
    %1047 = vsyncpa [#allocation3], 1
    %1048 = vsyncpa [#allocation5], 1

</llo_original>
